<compile_context>
chip_gen: v7x
topology: tpu7x:2x2x1
jax: 0.10.0
libtpu: 0.0.40
codegen_flags: <defaults>
</compile_context>

<pallas_src>
import jax
import jax.numpy as jnp
from jax.experimental import pallas as pl
from jax.experimental.pallas import tpu as pltpu


def _model_kernel(ids_ref, emb_ref, w_ref, b_ref, out_ref, acc_ref):
    """Grid = (B_tiles, V_tiles); axis 1 (V) is the reduction axis (last).

    ids_ref : (TB, S)  int32  VMEM   token ids, batch on sublanes
    emb_ref : (TV, D)  bf16   VMEM   streamed tile of the embedding table
    w_ref   : (D, 1)   f32    VMEM   linear weight (torch stores (1, D))
    b_ref   : (1, 1)   f32    SMEM   linear bias (scalar path)
    out_ref : (TB, 1)  f32    VMEM   final prediction (written at last V step)
    acc_ref : (TB, D)  f32    VMEM   scratch: sum-of-embeddings accumulator
    """
    vi = pl.program_id(1)
    nv = pl.num_programs(1)
    TB, S = ids_ref.shape
    TV = emb_ref.shape[0]

    @pl.when(vi == 0)
    def _init():
        acc_ref[...] = jnp.zeros_like(acc_ref)

    # counts[b, v] = #{ s : ids[b, s] == vi*TV + v }   (batch sublanes, vocab lanes)
    v_iota = jax.lax.broadcasted_iota(jnp.int32, (TB, TV), 1) + vi * TV
    counts = jnp.zeros((TB, TV), jnp.float32)
    for s in range(S):                       # S is small & static (unrolled)
        col = ids_ref[:, s:s + 1]            # (TB, 1)
        counts = counts + (v_iota == col).astype(jnp.float32)

    # Sum-of-embeddings accumulation on the MXU: (TB, TV) @ (TV, D) -> (TB, D)
    # counts are small integers (<= S) so the bf16 cast is exact.
    acc_ref[...] += jnp.dot(counts.astype(emb_ref.dtype), emb_ref[...],
                            preferred_element_type=jnp.float32)

    @pl.when(vi == nv - 1)
    def _finalize():
        pooled = acc_ref[...] * (1.0 / S)                           # mean over sequence
        logits = jnp.dot(pooled, w_ref[...],
                         preferred_element_type=jnp.float32) + b_ref[0, 0]
        out_ref[...] = jax.nn.sigmoid(logits)                       # f32 (v5e-safe)


def torch_model_forward(ids, emb_table, w, b, *, stream_dtype=jnp.bfloat16,
                        max_b_tile=256, target_tile_bytes=2 * 1024 * 1024):
    """ids: (B, S) int; emb_table: (V, D) f32; w: (D, 1) f32; b: (1, 1) f32 -> (B, 1) f32."""
    B, S = ids.shape
    V, D = emb_table.shape
    LANE = 128

    def _round_up(x, m):
        return ((x + m - 1) // m) * m

    # --- batch tiling: batch on sublanes -> multiple of 8.  One tile covers the
    # whole (padded) batch for typical sizes, so the table is streamed once. ---
    if B <= max_b_tile:
        tb = _round_up(B, 8)
        b_pad = tb
    else:
        tb = max_b_tile
        b_pad = _round_up(B, tb)

    # --- vocab tiling: vocab on lanes -> multiple of 128.  Size for a few MiB
    # of streamed table per step (amortize per-grid-step overhead, v7x-safe),
    # also capping the in-kernel counts buffer.  Small tables: ONE step. ---
    itemsize = jnp.dtype(stream_dtype).itemsize
    tv_stream = target_tile_bytes // (D * itemsize)
    tv_counts = target_tile_bytes // (tb * 4)          # f32 counts buffer
    tv = max(LANE, (min(tv_stream, tv_counts) // LANE) * LANE)
    v_pad = _round_up(V, LANE)
    if v_pad <= tv:
        tv = v_pad                                     # single reduction step
    else:
        v_pad = _round_up(V, tv)
    nv = v_pad // tv

    # --- pad + cast inputs (zero vocab rows contribute nothing; padded batch
    # rows use token 0 and are sliced off) ---
    emb_p = emb_table.astype(stream_dtype)
    if v_pad != V:
        emb_p = jnp.pad(emb_p, ((0, v_pad - V), (0, 0)))
    ids_p = ids.astype(jnp.int32)
    if b_pad != B:
        ids_p = jnp.pad(ids_p, ((0, b_pad - B), (0, 0)))
    w_f = jnp.asarray(w, jnp.float32).reshape(D, 1)
    bias = jnp.asarray(b, jnp.float32).reshape(1, 1)

    # Deeper buffering on the streamed table only pays for multi-step reductions
    # (v5e: lowest HBM bandwidth -> largest exposed-DMA fraction per step).
    emb_kwargs = {"pipeline_mode": pl.Buffered(3)} if nv >= 3 else {}
    emb_spec = pl.BlockSpec((tv, D), lambda bi, vi: (vi, 0), **emb_kwargs)

    grid = (b_pad // tb, nv)                 # (parallel batch, reduction V LAST)

    out = pl.pallas_call(
        _model_kernel,
        out_shape=jax.ShapeDtypeStruct((b_pad, 1), jnp.float32),
        grid_spec=pltpu.PrefetchScalarGridSpec(
            num_scalar_prefetch=0,
            grid=grid,
            in_specs=[
                pl.BlockSpec((tb, S), lambda bi, vi: (bi, 0)),      # ids
                emb_spec,                                           # emb tile (streamed)
                pl.BlockSpec((D, 1), lambda bi, vi: (0, 0)),        # linear weight
                pl.BlockSpec((1, 1), lambda bi, vi: (0, 0),
                             memory_space=pltpu.MemorySpace.SMEM),  # bias scalar
            ],
            out_specs=pl.BlockSpec((tb, 1), lambda bi, vi: (bi, 0)),
            scratch_shapes=[pltpu.VMEM((tb, D), jnp.float32)],      # embedding-sum acc
        ),
        compiler_params=pltpu.CompilerParams(
            dimension_semantics=("parallel", "arbitrary"),
            vmem_limit_bytes=32 * 1024 * 1024,   # safe on v5e/v6e and v7x (64 MiB phys)
        ),
    )(ids_p, emb_p, w_f, bias)

    return out[:B, :]


if __name__ == "__main__":
    # small shapes consistent with the module's forward
    batch = 8
    sentence_length = 8        # AvgPool1d window == sequence length
    vector_dim = 32
    vocab_size = 2048

    key = jax.random.PRNGKey(0)
    k_ids, k_emb, k_w, k_b = jax.random.split(key, 4)

    ids = jax.random.randint(k_ids, (batch, sentence_length), 0, vocab_size,
                             dtype=jnp.int32)
    emb_table = jax.random.normal(k_emb, (vocab_size, vector_dim), jnp.float32)
    # PyTorch nn.Linear(vector_dim, 1): weight (1, D), bias (1,). Stored as (D, 1).
    w = jax.random.normal(k_w, (vector_dim, 1), jnp.float32) * 0.1
    b = jax.random.normal(k_b, (1, 1), jnp.float32) * 0.1

    y_pred = torch_model_forward(ids, emb_table, w, b)
    jax.block_until_ready(y_pred)

    # reference in plain JAX (same semantics as the PyTorch forward with y=None),
    # using the same bf16-rounded table that the kernel streams
    emb_bf = emb_table.astype(jnp.bfloat16).astype(jnp.float32)
    ref = jax.nn.sigmoid(jnp.mean(emb_bf[ids], axis=1) @ w + b[0])
    assert y_pred.shape == (batch, 1)
    assert jnp.allclose(y_pred, ref, atol=1e-5, rtol=1e-5), "mismatch vs reference"

    print("KERNEL_OK")
</pallas_src>

<mosaic_0001>
module attributes {stable_mosaic.version = 11 : i64} {
  func.func @_model_kernel(%arg0: i32, %arg1: i32, %arg2: memref<8x8xi32, #tpu.memory_space<vmem>>, %arg3: memref<2048x32xbf16, #tpu.memory_space<vmem>>, %arg4: memref<32x1xf32, #tpu.memory_space<vmem>>, %arg5: memref<1x1xf32, #tpu.memory_space<smem>>, %arg6: memref<8x1xf32, #tpu.memory_space<vmem>>, %arg7: memref<8x32xf32, #tpu.memory_space<vmem>>) attributes {dimension_semantics = [#tpu.dimension_semantics<parallel>, #tpu.dimension_semantics<arbitrary>], iteration_bounds = array<i64: 1, 1>, scalar_prefetch = 0 : i64, scratch_operands = 1 : i64, tpu.core_type = #tpu.core_type<tc>, window_params = [{transform_indices = @transform_0, window_bounds = array<i64: 8, 8>}, {transform_indices = @transform_1, window_bounds = array<i64: 2048, 32>}, {pipeline_mode = #tpu.pipeline_mode<synchronous>, transform_indices = @transform_2, window_bounds = array<i64: 32, 1>}, {transform_indices = @transform_3, window_bounds = array<i64: 1, 1>}, {transform_indices = @transform_4, window_bounds = array<i64: 8, 1>}]} {
    %c0_i32 = arith.constant 0 : i32
    %0 = arith.cmpi eq, %arg1, %c0_i32 : i32
    %1 = arith.extui %0 : i1 to i32
    %c0_i32_0 = arith.constant 0 : i32
    %2 = arith.cmpi ne, %1, %c0_i32_0 : i32
    scf.if %2 {
      %cst_18 = arith.constant 0.000000e+00 : f32
      %65 = vector.broadcast %cst_18 : f32 to vector<8x32xf32>
      %c0_19 = arith.constant 0 : index
      %c0_20 = arith.constant 0 : index
      %66 = vector.load %arg7[%c0_19, %c0_20] : memref<8x32xf32, #tpu.memory_space<vmem>>, vector<8x32xf32>
      tpu.vector_store %arg7[%c0_19, %c0_20], %65 {strides = array<i32>} : memref<8x32xf32, #tpu.memory_space<vmem>>, vector<8x32xf32>,
    } else {
    }
    %3 = tpu.iota {dimensions = array<i32: 1>} : vector<8x2048xi32>
    %c2048_i32 = arith.constant 2048 : i32
    %4 = arith.muli %arg1, %c2048_i32 : i32
    %5 = vector.broadcast %4 : i32 to vector<8x2048xi32>
    %6 = arith.addi %3, %5 : vector<8x2048xi32>
    %cst = arith.constant 0.000000e+00 : f32
    %7 = vector.broadcast %cst : f32 to vector<8x2048xf32>
    %c0 = arith.constant 0 : index
    %c0_1 = arith.constant 0 : index
    %8 = vector.load %arg2[%c0, %c0_1] : memref<8x8xi32, #tpu.memory_space<vmem>>, vector<8x1xi32>
    %9 = vector.broadcast %8 : vector<8x1xi32> to vector<8x2048xi32>
    %10 = arith.cmpi eq, %6, %9 : vector<8x2048xi32>
    %11 = arith.extui %10 : vector<8x2048xi1> to vector<8x2048xi32>
    %12 = arith.sitofp %11 : vector<8x2048xi32> to vector<8x2048xf32>
    %13 = arith.addf %7, %12 : vector<8x2048xf32>
    %c0_2 = arith.constant 0 : index
    %c1 = arith.constant 1 : index
    %14 = vector.load %arg2[%c0_2, %c1] : memref<8x8xi32, #tpu.memory_space<vmem>>, vector<8x1xi32>
    %15 = vector.broadcast %14 : vector<8x1xi32> to vector<8x2048xi32>
    %16 = arith.cmpi eq, %6, %15 : vector<8x2048xi32>
    %17 = arith.extui %16 : vector<8x2048xi1> to vector<8x2048xi32>
    %18 = arith.sitofp %17 : vector<8x2048xi32> to vector<8x2048xf32>
    %19 = arith.addf %13, %18 : vector<8x2048xf32>
    %c0_3 = arith.constant 0 : index
    %c2 = arith.constant 2 : index
    %20 = vector.load %arg2[%c0_3, %c2] : memref<8x8xi32, #tpu.memory_space<vmem>>, vector<8x1xi32>
    %21 = vector.broadcast %20 : vector<8x1xi32> to vector<8x2048xi32>
    %22 = arith.cmpi eq, %6, %21 : vector<8x2048xi32>
    %23 = arith.extui %22 : vector<8x2048xi1> to vector<8x2048xi32>
    %24 = arith.sitofp %23 : vector<8x2048xi32> to vector<8x2048xf32>
    %25 = arith.addf %19, %24 : vector<8x2048xf32>
    %c0_4 = arith.constant 0 : index
    %c3 = arith.constant 3 : index
    %26 = vector.load %arg2[%c0_4, %c3] : memref<8x8xi32, #tpu.memory_space<vmem>>, vector<8x1xi32>
    %27 = vector.broadcast %26 : vector<8x1xi32> to vector<8x2048xi32>
    %28 = arith.cmpi eq, %6, %27 : vector<8x2048xi32>
    %29 = arith.extui %28 : vector<8x2048xi1> to vector<8x2048xi32>
    %30 = arith.sitofp %29 : vector<8x2048xi32> to vector<8x2048xf32>
    %31 = arith.addf %25, %30 : vector<8x2048xf32>
    %c0_5 = arith.constant 0 : index
    %c4 = arith.constant 4 : index
    %32 = vector.load %arg2[%c0_5, %c4] : memref<8x8xi32, #tpu.memory_space<vmem>>, vector<8x1xi32>
    %33 = vector.broadcast %32 : vector<8x1xi32> to vector<8x2048xi32>
    %34 = arith.cmpi eq, %6, %33 : vector<8x2048xi32>
    %35 = arith.extui %34 : vector<8x2048xi1> to vector<8x2048xi32>
    %36 = arith.sitofp %35 : vector<8x2048xi32> to vector<8x2048xf32>
    %37 = arith.addf %31, %36 : vector<8x2048xf32>
    %c0_6 = arith.constant 0 : index
    %c5 = arith.constant 5 : index
    %38 = vector.load %arg2[%c0_6, %c5] : memref<8x8xi32, #tpu.memory_space<vmem>>, vector<8x1xi32>
    %39 = vector.broadcast %38 : vector<8x1xi32> to vector<8x2048xi32>
    %40 = arith.cmpi eq, %6, %39 : vector<8x2048xi32>
    %41 = arith.extui %40 : vector<8x2048xi1> to vector<8x2048xi32>
    %42 = arith.sitofp %41 : vector<8x2048xi32> to vector<8x2048xf32>
    %43 = arith.addf %37, %42 : vector<8x2048xf32>
    %c0_7 = arith.constant 0 : index
    %c6 = arith.constant 6 : index
    %44 = vector.load %arg2[%c0_7, %c6] : memref<8x8xi32, #tpu.memory_space<vmem>>, vector<8x1xi32>
    %45 = vector.broadcast %44 : vector<8x1xi32> to vector<8x2048xi32>
    %46 = arith.cmpi eq, %6, %45 : vector<8x2048xi32>
    %47 = arith.extui %46 : vector<8x2048xi1> to vector<8x2048xi32>
    %48 = arith.sitofp %47 : vector<8x2048xi32> to vector<8x2048xf32>
    %49 = arith.addf %43, %48 : vector<8x2048xf32>
    %c0_8 = arith.constant 0 : index
    %c7 = arith.constant 7 : index
    %50 = vector.load %arg2[%c0_8, %c7] : memref<8x8xi32, #tpu.memory_space<vmem>>, vector<8x1xi32>
    %51 = vector.broadcast %50 : vector<8x1xi32> to vector<8x2048xi32>
    %52 = arith.cmpi eq, %6, %51 : vector<8x2048xi32>
    %53 = arith.extui %52 : vector<8x2048xi1> to vector<8x2048xi32>
    %54 = arith.sitofp %53 : vector<8x2048xi32> to vector<8x2048xf32>
    %55 = arith.addf %49, %54 : vector<8x2048xf32>
    %c0_9 = arith.constant 0 : index
    %c0_10 = arith.constant 0 : index
    %56 = vector.load %arg7[%c0_9, %c0_10] : memref<8x32xf32, #tpu.memory_space<vmem>>, vector<8x32xf32>
    %57 = arith.truncf %55 : vector<8x2048xf32> to vector<8x2048xbf16>
    %c0_11 = arith.constant 0 : index
    %c0_12 = arith.constant 0 : index
    %58 = vector.load %arg3[%c0_11, %c0_12] : memref<2048x32xbf16, #tpu.memory_space<vmem>>, vector<2048x32xbf16>
    %cst_13 = arith.constant dense<0.000000e+00> : vector<8x32xf32>
    %59 = tpu.matmul %57, %58, %cst_13 {dimension_numbers = #tpu.dot_dimension_numbers<[1], [0], [0], [1], [0, 0, 1, 1], [], []>} : vector<8x2048xbf16>, vector<2048x32xbf16>, vector<8x32xf32> -> vector<8x32xf32>
    %60 = arith.addf %56, %59 : vector<8x32xf32>
    %c0_14 = arith.constant 0 : index
    %c0_15 = arith.constant 0 : index
    %61 = vector.load %arg7[%c0_14, %c0_15] : memref<8x32xf32, #tpu.memory_space<vmem>>, vector<8x32xf32>
    tpu.vector_store %arg7[%c0_14, %c0_15], %60 {strides = array<i32>} : memref<8x32xf32, #tpu.memory_space<vmem>>, vector<8x32xf32>,
    %c0_i32_16 = arith.constant 0 : i32
    %62 = arith.cmpi eq, %arg1, %c0_i32_16 : i32
    %63 = arith.extui %62 : i1 to i32
    %c0_i32_17 = arith.constant 0 : i32
    %64 = arith.cmpi ne, %63, %c0_i32_17 : i32
    scf.if %64 {
      %c0_18 = arith.constant 0 : index
      %c0_19 = arith.constant 0 : index
      %65 = vector.load %arg7[%c0_18, %c0_19] : memref<8x32xf32, #tpu.memory_space<vmem>>, vector<8x32xf32>
      %cst_20 = arith.constant 1.250000e-01 : f32
      %66 = vector.broadcast %cst_20 : f32 to vector<8x32xf32>
      %67 = arith.mulf %65, %66 : vector<8x32xf32>
      %c0_21 = arith.constant 0 : index
      %c0_22 = arith.constant 0 : index
      %68 = vector.load %arg4[%c0_21, %c0_22] : memref<32x1xf32, #tpu.memory_space<vmem>>, vector<32x1xf32>
      %cst_23 = arith.constant dense<0.000000e+00> : vector<8x1xf32>
      %69 = tpu.matmul %67, %68, %cst_23 {dimension_numbers = #tpu.dot_dimension_numbers<[1], [0], [0], [1], [0, 0, 1, 1], [], []>} : vector<8x32xf32>, vector<32x1xf32>, vector<8x1xf32> -> vector<8x1xf32>
      %c0_24 = arith.constant 0 : index
      %c0_25 = arith.constant 0 : index
      %70 = memref.load %arg5[%c0_24, %c0_25] : memref<1x1xf32, #tpu.memory_space<smem>>
      %71 = vector.broadcast %70 : f32 to vector<8x1xf32>
      %72 = arith.addf %69, %71 : vector<8x1xf32>
      %73 = arith.negf %72 : vector<8x1xf32>
      %74 = math.exp %73 : vector<8x1xf32>
      %cst_26 = arith.constant 1.000000e+00 : f32
      %75 = vector.broadcast %cst_26 : f32 to vector<8x1xf32>
      %76 = arith.addf %75, %74 : vector<8x1xf32>
      %77 = arith.divf %75, %76 : vector<8x1xf32>
      %c0_27 = arith.constant 0 : index
      %c0_28 = arith.constant 0 : index
      %78 = vector.load %arg6[%c0_27, %c0_28] : memref<8x1xf32, #tpu.memory_space<vmem>>, vector<8x1xf32>
      tpu.vector_store %arg6[%c0_27, %c0_28], %77 {strides = array<i32>} : memref<8x1xf32, #tpu.memory_space<vmem>>, vector<8x1xf32>,
    } else {
    }
    return
  }
  func.func @transform_0(%arg0: i32, %arg1: i32) -> (i32, i32) {
    %c0_i32 = arith.constant 0 : i32
    %c0_i32_0 = arith.constant 0 : i32
    return %arg0, %c0_i32 : i32, i32
  }
  func.func @transform_1(%arg0: i32, %arg1: i32) -> (i32, i32) {
    %c0_i32 = arith.constant 0 : i32
    %c0_i32_0 = arith.constant 0 : i32
    return %arg1, %c0_i32 : i32, i32
  }
  func.func @transform_2(%arg0: i32, %arg1: i32) -> (i32, i32) {
    %c0_i32 = arith.constant 0 : i32
    %c0_i32_0 = arith.constant 0 : i32
    %c0_i32_1 = arith.constant 0 : i32
    return %c0_i32, %c0_i32_0 : i32, i32
  }
  func.func @transform_3(%arg0: i32, %arg1: i32) -> (i32, i32) {
    %c0_i32 = arith.constant 0 : i32
    %c0_i32_0 = arith.constant 0 : i32
    %c0_i32_1 = arith.constant 0 : i32
    return %c0_i32, %c0_i32_0 : i32, i32
  }
  func.func @transform_4(%arg0: i32, %arg1: i32) -> (i32, i32) {
    %c0_i32 = arith.constant 0 : i32
    %c0_i32_0 = arith.constant 0 : i32
    return %arg0, %c0_i32 : i32, i32
  }
}

</mosaic_0001>

<llo_original>
// kernel: tpu_custom_call.1
$region0: #{tpu_custom_call.1}
  #allocation0 [shape = 'u32[]', space=smem, size = 0x4, offset = 0x4, fixed_abs, tag = 'smem constant byte address 0x4 - core index']
  #allocation1 [shape = 'u32[144,128]{1,0:T(1,128)}', space=vmem, size = 0x12000, scoped, tag = 'internal scratch']
  #allocation2 [shape = 'f32[8,32]{1,0:T(8,128)}', space=vmem, size = 0x1000, scoped, tag = 'scratch operand']
  #allocation3 [shape = 'f32[1,1]{1,0:T(1,128)S(6)}', space=smem, size = 0x200, scoped, tag = 'scoped memory for tpu_custom_call.1']
  %s0 = inlined_call_operand.vmem [shape: s32[8,8], index: 0, kind: input, shape index: {}]
  %s1 = inlined_call_operand.vmem [shape: bf16[2048,32], index: 1, kind: input, shape index: {}]
  %s2 = inlined_call_operand.vmem [shape: f32[32,1], index: 2, kind: input, shape index: {}]
  %s3 = inlined_call_operand.<no memory space> [shape: f32[1,1], index: 3, kind: input, shape index: {}]
  %s4 = inlined_call_operand.vmem [shape: f32[8,1], index: 4, kind: output, shape index: {}]
  %s5 = sld [smem:[#allocation0]]
  $region34: #{tpu_custom_call.1} parent=0
    _
  %s7 = ssub.s32 1, %s5
  %s8 = scalar_select 0, %s7, %s5
  %9 = sst [smem:[#allocation3]] %s3
  // Predicated region
  $region2: #{tpu_custom_call.1} parent=0 // pred_check
    _
  $region3: #{tpu_custom_call.1} parent=0 // pred_check_branch
    %11 = sbr.rel (0) target = $region5
  $region4: #{tpu_custom_call.1} parent=0 // pred_region
    _
  $region5: #{tpu_custom_call.1} parent=0 // pred_fallthru
    _
  // Predicated region
  $region6: #{tpu_custom_call.1} parent=0 // pred_check
    _
  $region7: #{tpu_custom_call.1} parent=0 // pred_check_branch
    %13 = sbr.rel (0) target = $region9
  $region8: #{tpu_custom_call.1} parent=0 // pred_region
    _
  $region9: #{tpu_custom_call.1} parent=0 // pred_fallthru
    _
  // Predicated region
  $region10: #{tpu_custom_call.1} parent=0 // pred_check
    _
  $region11: #{tpu_custom_call.1} parent=0 // pred_check_branch
    %15 = sbr.rel (0) target = $region13
  $region12: #{tpu_custom_call.1} parent=0 // pred_region
    _
  $region13: #{tpu_custom_call.1} parent=0 // pred_fallthru
    _
  // Predicated region
  $region14: #{tpu_custom_call.1} parent=0 // pred_check
    _
  $region15: #{tpu_custom_call.1} parent=0 // pred_check_branch
    %17 = sbr.rel (0) target = $region17
  $region16: #{tpu_custom_call.1} parent=0 // pred_region
    _
  $region17: #{tpu_custom_call.1} parent=0 // pred_fallthru
    _
  %p19 = scmp.eq.s32.totalorder 0, 0
  // Predicated region
  $region18: #{tpu_custom_call.1} parent=0 // pred_check
    %p20 = pneg %p19
  $region19: #{tpu_custom_call.1} parent=0 // pred_check_branch
    %22 = sbr.rel (%p20) target = $region21
  $region20: #{tpu_custom_call.1} parent=0 // pred_region
    %vm23 = vcmask 261120
    %24 = vst.msk [vmem:[#allocation2] sm:$0xff] %vm23, 0.0
  $region21: #{tpu_custom_call.1} parent=0 // pred_fallthru
    _
  %v25 = vlaneseq
  %v26 = vand.u32 %v25, 127
  %v27 = vadd.s32 %v26, 128
  %v28 = vadd.s32 %v26, 256
  %v29 = vadd.s32 %v26, 384
  %v30 = vadd.s32 %v26, 512
  %v31 = vadd.s32 %v26, 640
  %v32 = vadd.s32 %v26, 768
  %v33 = vadd.s32 %v26, 896
  %v34 = vadd.s32 %v26, 1024
  %v35 = vadd.s32 %v26, 1152
  %v36 = vadd.s32 %v26, 1280
  %v37 = vadd.s32 %v26, 1408
  %v38 = vadd.s32 %v26, 1536
  %v39 = vadd.s32 %v26, 1664
  %v40 = vadd.s32 %v26, 1792
  %v41 = vadd.s32 %v26, 1920
  %s42 = smul.u32 0, 2048
  %v43 = vstv %s42
  %v44 = vadd.s32 %v26, %v43
  %v45 = vadd.s32 %v27, %v43
  %v46 = vadd.s32 %v28, %v43
  %v47 = vadd.s32 %v29, %v43
  %v48 = vadd.s32 %v30, %v43
  %v49 = vadd.s32 %v31, %v43
  %v50 = vadd.s32 %v32, %v43
  %v51 = vadd.s32 %v33, %v43
  %v52 = vadd.s32 %v34, %v43
  %v53 = vadd.s32 %v35, %v43
  %v54 = vadd.s32 %v36, %v43
  %v55 = vadd.s32 %v37, %v43
  %v56 = vadd.s32 %v38, %v43
  %v57 = vadd.s32 %v39, %v43
  %v58 = vadd.s32 %v40, %v43
  %v59 = vadd.s32 %v41, %v43
  %v60 = vld [vmem:[%s0] sm:$0xff]
  %61 = vset.pattern.permute.xlu0 0
  %62 = vperm.xlu0 %61, %v60
  %v63 = vpop.permute.xlu0 %62
  %vm64 = vcmp.eq.s32.totalorder %v44, %v63
  %vm65 = vcmp.eq.s32.totalorder %v45, %v63
  %vm66 = vcmp.eq.s32.totalorder %v46, %v63
  %vm67 = vcmp.eq.s32.totalorder %v47, %v63
  %vm68 = vcmp.eq.s32.totalorder %v48, %v63
  %vm69 = vcmp.eq.s32.totalorder %v49, %v63
  %vm70 = vcmp.eq.s32.totalorder %v50, %v63
  %vm71 = vcmp.eq.s32.totalorder %v51, %v63
  %vm72 = vcmp.eq.s32.totalorder %v52, %v63
  %vm73 = vcmp.eq.s32.totalorder %v53, %v63
  %vm74 = vcmp.eq.s32.totalorder %v54, %v63
  %vm75 = vcmp.eq.s32.totalorder %v55, %v63
  %vm76 = vcmp.eq.s32.totalorder %v56, %v63
  %vm77 = vcmp.eq.s32.totalorder %v57, %v63
  %vm78 = vcmp.eq.s32.totalorder %v58, %v63
  %vm79 = vcmp.eq.s32.totalorder %v59, %v63
  %v80 = vsel %vm64, 1, 0
  %v81 = vsel %vm65, 1, 0
  %v82 = vsel %vm66, 1, 0
  %v83 = vsel %vm67, 1, 0
  %v84 = vsel %vm68, 1, 0
  %v85 = vsel %vm69, 1, 0
  %v86 = vsel %vm70, 1, 0
  %v87 = vsel %vm71, 1, 0
  %v88 = vsel %vm72, 1, 0
  %v89 = vsel %vm73, 1, 0
  %v90 = vsel %vm74, 1, 0
  %v91 = vsel %vm75, 1, 0
  %v92 = vsel %vm76, 1, 0
  %v93 = vsel %vm77, 1, 0
  %v94 = vsel %vm78, 1, 0
  %v95 = vsel %vm79, 1, 0
  %v96 = vcvt.s32.f32 %v80
  %v97 = vcvt.s32.f32 %v81
  %v98 = vcvt.s32.f32 %v82
  %v99 = vcvt.s32.f32 %v83
  %v100 = vcvt.s32.f32 %v84
  %v101 = vcvt.s32.f32 %v85
  %v102 = vcvt.s32.f32 %v86
  %v103 = vcvt.s32.f32 %v87
  %v104 = vcvt.s32.f32 %v88
  %v105 = vcvt.s32.f32 %v89
  %v106 = vcvt.s32.f32 %v90
  %v107 = vcvt.s32.f32 %v91
  %v108 = vcvt.s32.f32 %v92
  %v109 = vcvt.s32.f32 %v93
  %v110 = vcvt.s32.f32 %v94
  %v111 = vcvt.s32.f32 %v95
  %v112 = vadd.f32 %v96, 0.0
  %v113 = vadd.f32 %v97, 0.0
  %v114 = vadd.f32 %v98, 0.0
  %v115 = vadd.f32 %v99, 0.0
  %v116 = vadd.f32 %v100, 0.0
  %v117 = vadd.f32 %v101, 0.0
  %v118 = vadd.f32 %v102, 0.0
  %v119 = vadd.f32 %v103, 0.0
  %v120 = vadd.f32 %v104, 0.0
  %v121 = vadd.f32 %v105, 0.0
  %v122 = vadd.f32 %v106, 0.0
  %v123 = vadd.f32 %v107, 0.0
  %v124 = vadd.f32 %v108, 0.0
  %v125 = vadd.f32 %v109, 0.0
  %v126 = vadd.f32 %v110, 0.0
  %v127 = vadd.f32 %v111, 0.0
  %128 = vset.pattern.permute.xlu0 1
  %129 = vperm.xlu0 %128, %v60
  %v130 = vpop.permute.xlu0 %129
  %vm131 = vcmp.eq.s32.totalorder %v44, %v130
  %vm132 = vcmp.eq.s32.totalorder %v45, %v130
  %vm133 = vcmp.eq.s32.totalorder %v46, %v130
  %vm134 = vcmp.eq.s32.totalorder %v47, %v130
  %vm135 = vcmp.eq.s32.totalorder %v48, %v130
  %vm136 = vcmp.eq.s32.totalorder %v49, %v130
  %vm137 = vcmp.eq.s32.totalorder %v50, %v130
  %vm138 = vcmp.eq.s32.totalorder %v51, %v130
  %vm139 = vcmp.eq.s32.totalorder %v52, %v130
  %vm140 = vcmp.eq.s32.totalorder %v53, %v130
  %vm141 = vcmp.eq.s32.totalorder %v54, %v130
  %vm142 = vcmp.eq.s32.totalorder %v55, %v130
  %vm143 = vcmp.eq.s32.totalorder %v56, %v130
  %vm144 = vcmp.eq.s32.totalorder %v57, %v130
  %vm145 = vcmp.eq.s32.totalorder %v58, %v130
  %vm146 = vcmp.eq.s32.totalorder %v59, %v130
  %v147 = vsel %vm131, 1, 0
  %v148 = vsel %vm132, 1, 0
  %v149 = vsel %vm133, 1, 0
  %v150 = vsel %vm134, 1, 0
  %v151 = vsel %vm135, 1, 0
  %v152 = vsel %vm136, 1, 0
  %v153 = vsel %vm137, 1, 0
  %v154 = vsel %vm138, 1, 0
  %v155 = vsel %vm139, 1, 0
  %v156 = vsel %vm140, 1, 0
  %v157 = vsel %vm141, 1, 0
  %v158 = vsel %vm142, 1, 0
  %v159 = vsel %vm143, 1, 0
  %v160 = vsel %vm144, 1, 0
  %v161 = vsel %vm145, 1, 0
  %v162 = vsel %vm146, 1, 0
  %v163 = vcvt.s32.f32 %v147
  %v164 = vcvt.s32.f32 %v148
  %v165 = vcvt.s32.f32 %v149
  %v166 = vcvt.s32.f32 %v150
  %v167 = vcvt.s32.f32 %v151
  %v168 = vcvt.s32.f32 %v152
  %v169 = vcvt.s32.f32 %v153
  %v170 = vcvt.s32.f32 %v154
  %v171 = vcvt.s32.f32 %v155
  %v172 = vcvt.s32.f32 %v156
  %v173 = vcvt.s32.f32 %v157
  %v174 = vcvt.s32.f32 %v158
  %v175 = vcvt.s32.f32 %v159
  %v176 = vcvt.s32.f32 %v160
  %v177 = vcvt.s32.f32 %v161
  %v178 = vcvt.s32.f32 %v162
  %v179 = vadd.f32 %v112, %v163
  %v180 = vadd.f32 %v113, %v164
  %v181 = vadd.f32 %v114, %v165
  %v182 = vadd.f32 %v115, %v166
  %v183 = vadd.f32 %v116, %v167
  %v184 = vadd.f32 %v117, %v168
  %v185 = vadd.f32 %v118, %v169
  %v186 = vadd.f32 %v119, %v170
  %v187 = vadd.f32 %v120, %v171
  %v188 = vadd.f32 %v121, %v172
  %v189 = vadd.f32 %v122, %v173
  %v190 = vadd.f32 %v123, %v174
  %v191 = vadd.f32 %v124, %v175
  %v192 = vadd.f32 %v125, %v176
  %v193 = vadd.f32 %v126, %v177
  %v194 = vadd.f32 %v127, %v178
  %195 = vset.pattern.permute.xlu0 2
  %196 = vperm.xlu0 %195, %v60
  %v197 = vpop.permute.xlu0 %196
  %vm198 = vcmp.eq.s32.totalorder %v44, %v197
  %vm199 = vcmp.eq.s32.totalorder %v45, %v197
  %vm200 = vcmp.eq.s32.totalorder %v46, %v197
  %vm201 = vcmp.eq.s32.totalorder %v47, %v197
  %vm202 = vcmp.eq.s32.totalorder %v48, %v197
  %vm203 = vcmp.eq.s32.totalorder %v49, %v197
  %vm204 = vcmp.eq.s32.totalorder %v50, %v197
  %vm205 = vcmp.eq.s32.totalorder %v51, %v197
  %vm206 = vcmp.eq.s32.totalorder %v52, %v197
  %vm207 = vcmp.eq.s32.totalorder %v53, %v197
  %vm208 = vcmp.eq.s32.totalorder %v54, %v197
  %vm209 = vcmp.eq.s32.totalorder %v55, %v197
  %vm210 = vcmp.eq.s32.totalorder %v56, %v197
  %vm211 = vcmp.eq.s32.totalorder %v57, %v197
  %vm212 = vcmp.eq.s32.totalorder %v58, %v197
  %vm213 = vcmp.eq.s32.totalorder %v59, %v197
  %v214 = vsel %vm198, 1, 0
  %v215 = vsel %vm199, 1, 0
  %v216 = vsel %vm200, 1, 0
  %v217 = vsel %vm201, 1, 0
  %v218 = vsel %vm202, 1, 0
  %v219 = vsel %vm203, 1, 0
  %v220 = vsel %vm204, 1, 0
  %v221 = vsel %vm205, 1, 0
  %v222 = vsel %vm206, 1, 0
  %v223 = vsel %vm207, 1, 0
  %v224 = vsel %vm208, 1, 0
  %v225 = vsel %vm209, 1, 0
  %v226 = vsel %vm210, 1, 0
  %v227 = vsel %vm211, 1, 0
  %v228 = vsel %vm212, 1, 0
  %v229 = vsel %vm213, 1, 0
  %v230 = vcvt.s32.f32 %v214
  %v231 = vcvt.s32.f32 %v215
  %v232 = vcvt.s32.f32 %v216
  %v233 = vcvt.s32.f32 %v217
  %v234 = vcvt.s32.f32 %v218
  %v235 = vcvt.s32.f32 %v219
  %v236 = vcvt.s32.f32 %v220
  %v237 = vcvt.s32.f32 %v221
  %v238 = vcvt.s32.f32 %v222
  %v239 = vcvt.s32.f32 %v223
  %v240 = vcvt.s32.f32 %v224
  %v241 = vcvt.s32.f32 %v225
  %v242 = vcvt.s32.f32 %v226
  %v243 = vcvt.s32.f32 %v227
  %v244 = vcvt.s32.f32 %v228
  %v245 = vcvt.s32.f32 %v229
  %v246 = vadd.f32 %v179, %v230
  %v247 = vadd.f32 %v180, %v231
  %v248 = vadd.f32 %v181, %v232
  %v249 = vadd.f32 %v182, %v233
  %v250 = vadd.f32 %v183, %v234
  %v251 = vadd.f32 %v184, %v235
  %v252 = vadd.f32 %v185, %v236
  %v253 = vadd.f32 %v186, %v237
  %v254 = vadd.f32 %v187, %v238
  %v255 = vadd.f32 %v188, %v239
  %v256 = vadd.f32 %v189, %v240
  %v257 = vadd.f32 %v190, %v241
  %v258 = vadd.f32 %v191, %v242
  %v259 = vadd.f32 %v192, %v243
  %v260 = vadd.f32 %v193, %v244
  %v261 = vadd.f32 %v194, %v245
  %262 = vset.pattern.permute.xlu0 3
  %263 = vperm.xlu0 %262, %v60
  %v264 = vpop.permute.xlu0 %263
  %vm265 = vcmp.eq.s32.totalorder %v44, %v264
  %vm266 = vcmp.eq.s32.totalorder %v45, %v264
  %vm267 = vcmp.eq.s32.totalorder %v46, %v264
  %vm268 = vcmp.eq.s32.totalorder %v47, %v264
  %vm269 = vcmp.eq.s32.totalorder %v48, %v264
  %vm270 = vcmp.eq.s32.totalorder %v49, %v264
  %vm271 = vcmp.eq.s32.totalorder %v50, %v264
  %vm272 = vcmp.eq.s32.totalorder %v51, %v264
  %vm273 = vcmp.eq.s32.totalorder %v52, %v264
  %vm274 = vcmp.eq.s32.totalorder %v53, %v264
  %vm275 = vcmp.eq.s32.totalorder %v54, %v264
  %vm276 = vcmp.eq.s32.totalorder %v55, %v264
  %vm277 = vcmp.eq.s32.totalorder %v56, %v264
  %vm278 = vcmp.eq.s32.totalorder %v57, %v264
  %vm279 = vcmp.eq.s32.totalorder %v58, %v264
  %vm280 = vcmp.eq.s32.totalorder %v59, %v264
  %v281 = vsel %vm265, 1, 0
  %v282 = vsel %vm266, 1, 0
  %v283 = vsel %vm267, 1, 0
  %v284 = vsel %vm268, 1, 0
  %v285 = vsel %vm269, 1, 0
  %v286 = vsel %vm270, 1, 0
  %v287 = vsel %vm271, 1, 0
  %v288 = vsel %vm272, 1, 0
  %v289 = vsel %vm273, 1, 0
  %v290 = vsel %vm274, 1, 0
  %v291 = vsel %vm275, 1, 0
  %v292 = vsel %vm276, 1, 0
  %v293 = vsel %vm277, 1, 0
  %v294 = vsel %vm278, 1, 0
  %v295 = vsel %vm279, 1, 0
  %v296 = vsel %vm280, 1, 0
  %v297 = vcvt.s32.f32 %v281
  %v298 = vcvt.s32.f32 %v282
  %v299 = vcvt.s32.f32 %v283
  %v300 = vcvt.s32.f32 %v284
  %v301 = vcvt.s32.f32 %v285
  %v302 = vcvt.s32.f32 %v286
  %v303 = vcvt.s32.f32 %v287
  %v304 = vcvt.s32.f32 %v288
  %v305 = vcvt.s32.f32 %v289
  %v306 = vcvt.s32.f32 %v290
  %v307 = vcvt.s32.f32 %v291
  %v308 = vcvt.s32.f32 %v292
  %v309 = vcvt.s32.f32 %v293
  %v310 = vcvt.s32.f32 %v294
  %v311 = vcvt.s32.f32 %v295
  %v312 = vcvt.s32.f32 %v296
  %v313 = vadd.f32 %v246, %v297
  %v314 = vadd.f32 %v247, %v298
  %v315 = vadd.f32 %v248, %v299
  %v316 = vadd.f32 %v249, %v300
  %v317 = vadd.f32 %v250, %v301
  %v318 = vadd.f32 %v251, %v302
  %v319 = vadd.f32 %v252, %v303
  %v320 = vadd.f32 %v253, %v304
  %v321 = vadd.f32 %v254, %v305
  %v322 = vadd.f32 %v255, %v306
  %v323 = vadd.f32 %v256, %v307
  %v324 = vadd.f32 %v257, %v308
  %v325 = vadd.f32 %v258, %v309
  %v326 = vadd.f32 %v259, %v310
  %v327 = vadd.f32 %v260, %v311
  %v328 = vadd.f32 %v261, %v312
  %329 = vset.pattern.permute.xlu0 4
  %330 = vperm.xlu0 %329, %v60
  %v331 = vpop.permute.xlu0 %330
  %vm332 = vcmp.eq.s32.totalorder %v44, %v331
  %vm333 = vcmp.eq.s32.totalorder %v45, %v331
  %vm334 = vcmp.eq.s32.totalorder %v46, %v331
  %vm335 = vcmp.eq.s32.totalorder %v47, %v331
  %vm336 = vcmp.eq.s32.totalorder %v48, %v331
  %vm337 = vcmp.eq.s32.totalorder %v49, %v331
  %vm338 = vcmp.eq.s32.totalorder %v50, %v331
  %vm339 = vcmp.eq.s32.totalorder %v51, %v331
  %vm340 = vcmp.eq.s32.totalorder %v52, %v331
  %vm341 = vcmp.eq.s32.totalorder %v53, %v331
  %vm342 = vcmp.eq.s32.totalorder %v54, %v331
  %vm343 = vcmp.eq.s32.totalorder %v55, %v331
  %vm344 = vcmp.eq.s32.totalorder %v56, %v331
  %vm345 = vcmp.eq.s32.totalorder %v57, %v331
  %vm346 = vcmp.eq.s32.totalorder %v58, %v331
  %vm347 = vcmp.eq.s32.totalorder %v59, %v331
  %v348 = vsel %vm332, 1, 0
  %v349 = vsel %vm333, 1, 0
  %v350 = vsel %vm334, 1, 0
  %v351 = vsel %vm335, 1, 0
  %v352 = vsel %vm336, 1, 0
  %v353 = vsel %vm337, 1, 0
  %v354 = vsel %vm338, 1, 0
  %v355 = vsel %vm339, 1, 0
  %v356 = vsel %vm340, 1, 0
  %v357 = vsel %vm341, 1, 0
  %v358 = vsel %vm342, 1, 0
  %v359 = vsel %vm343, 1, 0
  %v360 = vsel %vm344, 1, 0
  %v361 = vsel %vm345, 1, 0
  %v362 = vsel %vm346, 1, 0
  %v363 = vsel %vm347, 1, 0
  %v364 = vcvt.s32.f32 %v348
  %v365 = vcvt.s32.f32 %v349
  %v366 = vcvt.s32.f32 %v350
  %v367 = vcvt.s32.f32 %v351
  %v368 = vcvt.s32.f32 %v352
  %v369 = vcvt.s32.f32 %v353
  %v370 = vcvt.s32.f32 %v354
  %v371 = vcvt.s32.f32 %v355
  %v372 = vcvt.s32.f32 %v356
  %v373 = vcvt.s32.f32 %v357
  %v374 = vcvt.s32.f32 %v358
  %v375 = vcvt.s32.f32 %v359
  %v376 = vcvt.s32.f32 %v360
  %v377 = vcvt.s32.f32 %v361
  %v378 = vcvt.s32.f32 %v362
  %v379 = vcvt.s32.f32 %v363
  %v380 = vadd.f32 %v313, %v364
  %v381 = vadd.f32 %v314, %v365
  %v382 = vadd.f32 %v315, %v366
  %v383 = vadd.f32 %v316, %v367
  %v384 = vadd.f32 %v317, %v368
  %v385 = vadd.f32 %v318, %v369
  %v386 = vadd.f32 %v319, %v370
  %v387 = vadd.f32 %v320, %v371
  %v388 = vadd.f32 %v321, %v372
  %v389 = vadd.f32 %v322, %v373
  %v390 = vadd.f32 %v323, %v374
  %v391 = vadd.f32 %v324, %v375
  %v392 = vadd.f32 %v325, %v376
  %v393 = vadd.f32 %v326, %v377
  %v394 = vadd.f32 %v327, %v378
  %v395 = vadd.f32 %v328, %v379
  %396 = vset.pattern.permute.xlu0 5
  %397 = vperm.xlu0 %396, %v60
  %v398 = vpop.permute.xlu0 %397
  %vm399 = vcmp.eq.s32.totalorder %v44, %v398
  %vm400 = vcmp.eq.s32.totalorder %v45, %v398
  %vm401 = vcmp.eq.s32.totalorder %v46, %v398
  %vm402 = vcmp.eq.s32.totalorder %v47, %v398
  %vm403 = vcmp.eq.s32.totalorder %v48, %v398
  %vm404 = vcmp.eq.s32.totalorder %v49, %v398
  %vm405 = vcmp.eq.s32.totalorder %v50, %v398
  %vm406 = vcmp.eq.s32.totalorder %v51, %v398
  %vm407 = vcmp.eq.s32.totalorder %v52, %v398
  %vm408 = vcmp.eq.s32.totalorder %v53, %v398
  %vm409 = vcmp.eq.s32.totalorder %v54, %v398
  %vm410 = vcmp.eq.s32.totalorder %v55, %v398
  %vm411 = vcmp.eq.s32.totalorder %v56, %v398
  %vm412 = vcmp.eq.s32.totalorder %v57, %v398
  %vm413 = vcmp.eq.s32.totalorder %v58, %v398
  %vm414 = vcmp.eq.s32.totalorder %v59, %v398
  %v415 = vsel %vm399, 1, 0
  %v416 = vsel %vm400, 1, 0
  %v417 = vsel %vm401, 1, 0
  %v418 = vsel %vm402, 1, 0
  %v419 = vsel %vm403, 1, 0
  %v420 = vsel %vm404, 1, 0
  %v421 = vsel %vm405, 1, 0
  %v422 = vsel %vm406, 1, 0
  %v423 = vsel %vm407, 1, 0
  %v424 = vsel %vm408, 1, 0
  %v425 = vsel %vm409, 1, 0
  %v426 = vsel %vm410, 1, 0
  %v427 = vsel %vm411, 1, 0
  %v428 = vsel %vm412, 1, 0
  %v429 = vsel %vm413, 1, 0
  %v430 = vsel %vm414, 1, 0
  %v431 = vcvt.s32.f32 %v415
  %v432 = vcvt.s32.f32 %v416
  %v433 = vcvt.s32.f32 %v417
  %v434 = vcvt.s32.f32 %v418
  %v435 = vcvt.s32.f32 %v419
  %v436 = vcvt.s32.f32 %v420
  %v437 = vcvt.s32.f32 %v421
  %v438 = vcvt.s32.f32 %v422
  %v439 = vcvt.s32.f32 %v423
  %v440 = vcvt.s32.f32 %v424
  %v441 = vcvt.s32.f32 %v425
  %v442 = vcvt.s32.f32 %v426
  %v443 = vcvt.s32.f32 %v427
  %v444 = vcvt.s32.f32 %v428
  %v445 = vcvt.s32.f32 %v429
  %v446 = vcvt.s32.f32 %v430
  %v447 = vadd.f32 %v380, %v431
  %v448 = vadd.f32 %v381, %v432
  %v449 = vadd.f32 %v382, %v433
  %v450 = vadd.f32 %v383, %v434
  %v451 = vadd.f32 %v384, %v435
  %v452 = vadd.f32 %v385, %v436
  %v453 = vadd.f32 %v386, %v437
  %v454 = vadd.f32 %v387, %v438
  %v455 = vadd.f32 %v388, %v439
  %v456 = vadd.f32 %v389, %v440
  %v457 = vadd.f32 %v390, %v441
  %v458 = vadd.f32 %v391, %v442
  %v459 = vadd.f32 %v392, %v443
  %v460 = vadd.f32 %v393, %v444
  %v461 = vadd.f32 %v394, %v445
  %v462 = vadd.f32 %v395, %v446
  %463 = vset.pattern.permute.xlu0 6
  %464 = vperm.xlu0 %463, %v60
  %v465 = vpop.permute.xlu0 %464
  %vm466 = vcmp.eq.s32.totalorder %v44, %v465
  %vm467 = vcmp.eq.s32.totalorder %v45, %v465
  %vm468 = vcmp.eq.s32.totalorder %v46, %v465
  %vm469 = vcmp.eq.s32.totalorder %v47, %v465
  %vm470 = vcmp.eq.s32.totalorder %v48, %v465
  %vm471 = vcmp.eq.s32.totalorder %v49, %v465
  %vm472 = vcmp.eq.s32.totalorder %v50, %v465
  %vm473 = vcmp.eq.s32.totalorder %v51, %v465
  %vm474 = vcmp.eq.s32.totalorder %v52, %v465
  %vm475 = vcmp.eq.s32.totalorder %v53, %v465
  %vm476 = vcmp.eq.s32.totalorder %v54, %v465
  %vm477 = vcmp.eq.s32.totalorder %v55, %v465
  %vm478 = vcmp.eq.s32.totalorder %v56, %v465
  %vm479 = vcmp.eq.s32.totalorder %v57, %v465
  %vm480 = vcmp.eq.s32.totalorder %v58, %v465
  %vm481 = vcmp.eq.s32.totalorder %v59, %v465
  %v482 = vsel %vm466, 1, 0
  %v483 = vsel %vm467, 1, 0
  %v484 = vsel %vm468, 1, 0
  %v485 = vsel %vm469, 1, 0
  %v486 = vsel %vm470, 1, 0
  %v487 = vsel %vm471, 1, 0
  %v488 = vsel %vm472, 1, 0
  %v489 = vsel %vm473, 1, 0
  %v490 = vsel %vm474, 1, 0
  %v491 = vsel %vm475, 1, 0
  %v492 = vsel %vm476, 1, 0
  %v493 = vsel %vm477, 1, 0
  %v494 = vsel %vm478, 1, 0
  %v495 = vsel %vm479, 1, 0
  %v496 = vsel %vm480, 1, 0
  %v497 = vsel %vm481, 1, 0
  %v498 = vcvt.s32.f32 %v482
  %v499 = vcvt.s32.f32 %v483
  %v500 = vcvt.s32.f32 %v484
  %v501 = vcvt.s32.f32 %v485
  %v502 = vcvt.s32.f32 %v486
  %v503 = vcvt.s32.f32 %v487
  %v504 = vcvt.s32.f32 %v488
  %v505 = vcvt.s32.f32 %v489
  %v506 = vcvt.s32.f32 %v490
  %v507 = vcvt.s32.f32 %v491
  %v508 = vcvt.s32.f32 %v492
  %v509 = vcvt.s32.f32 %v493
  %v510 = vcvt.s32.f32 %v494
  %v511 = vcvt.s32.f32 %v495
  %v512 = vcvt.s32.f32 %v496
  %v513 = vcvt.s32.f32 %v497
  %v514 = vadd.f32 %v447, %v498
  %v515 = vadd.f32 %v448, %v499
  %v516 = vadd.f32 %v449, %v500
  %v517 = vadd.f32 %v450, %v501
  %v518 = vadd.f32 %v451, %v502
  %v519 = vadd.f32 %v452, %v503
  %v520 = vadd.f32 %v453, %v504
  %v521 = vadd.f32 %v454, %v505
  %v522 = vadd.f32 %v455, %v506
  %v523 = vadd.f32 %v456, %v507
  %v524 = vadd.f32 %v457, %v508
  %v525 = vadd.f32 %v458, %v509
  %v526 = vadd.f32 %v459, %v510
  %v527 = vadd.f32 %v460, %v511
  %v528 = vadd.f32 %v461, %v512
  %v529 = vadd.f32 %v462, %v513
  %530 = vset.pattern.permute.xlu0 7
  %531 = vperm.xlu0 %530, %v60
  %v532 = vpop.permute.xlu0 %531
  %vm533 = vcmp.eq.s32.totalorder %v44, %v532
  %vm534 = vcmp.eq.s32.totalorder %v45, %v532
  %vm535 = vcmp.eq.s32.totalorder %v46, %v532
  %vm536 = vcmp.eq.s32.totalorder %v47, %v532
  %vm537 = vcmp.eq.s32.totalorder %v48, %v532
  %vm538 = vcmp.eq.s32.totalorder %v49, %v532
  %vm539 = vcmp.eq.s32.totalorder %v50, %v532
  %vm540 = vcmp.eq.s32.totalorder %v51, %v532
  %vm541 = vcmp.eq.s32.totalorder %v52, %v532
  %vm542 = vcmp.eq.s32.totalorder %v53, %v532
  %vm543 = vcmp.eq.s32.totalorder %v54, %v532
  %vm544 = vcmp.eq.s32.totalorder %v55, %v532
  %vm545 = vcmp.eq.s32.totalorder %v56, %v532
  %vm546 = vcmp.eq.s32.totalorder %v57, %v532
  %vm547 = vcmp.eq.s32.totalorder %v58, %v532
  %vm548 = vcmp.eq.s32.totalorder %v59, %v532
  %v549 = vsel %vm533, 1, 0
  %v550 = vsel %vm534, 1, 0
  %v551 = vsel %vm535, 1, 0
  %v552 = vsel %vm536, 1, 0
  %v553 = vsel %vm537, 1, 0
  %v554 = vsel %vm538, 1, 0
  %v555 = vsel %vm539, 1, 0
  %v556 = vsel %vm540, 1, 0
  %v557 = vsel %vm541, 1, 0
  %v558 = vsel %vm542, 1, 0
  %v559 = vsel %vm543, 1, 0
  %v560 = vsel %vm544, 1, 0
  %v561 = vsel %vm545, 1, 0
  %v562 = vsel %vm546, 1, 0
  %v563 = vsel %vm547, 1, 0
  %v564 = vsel %vm548, 1, 0
  %v565 = vcvt.s32.f32 %v549
  %v566 = vcvt.s32.f32 %v550
  %v567 = vcvt.s32.f32 %v551
  %v568 = vcvt.s32.f32 %v552
  %v569 = vcvt.s32.f32 %v553
  %v570 = vcvt.s32.f32 %v554
  %v571 = vcvt.s32.f32 %v555
  %v572 = vcvt.s32.f32 %v556
  %v573 = vcvt.s32.f32 %v557
  %v574 = vcvt.s32.f32 %v558
  %v575 = vcvt.s32.f32 %v559
  %v576 = vcvt.s32.f32 %v560
  %v577 = vcvt.s32.f32 %v561
  %v578 = vcvt.s32.f32 %v562
  %v579 = vcvt.s32.f32 %v563
  %v580 = vcvt.s32.f32 %v564
  %v581 = vadd.f32 %v514, %v565
  %v582 = vadd.f32 %v515, %v566
  %v583 = vadd.f32 %v516, %v567
  %v584 = vadd.f32 %v517, %v568
  %v585 = vadd.f32 %v518, %v569
  %v586 = vadd.f32 %v519, %v570
  %v587 = vadd.f32 %v520, %v571
  %v588 = vadd.f32 %v521, %v572
  %v589 = vadd.f32 %v522, %v573
  %v590 = vadd.f32 %v523, %v574
  %v591 = vadd.f32 %v524, %v575
  %v592 = vadd.f32 %v525, %v576
  %v593 = vadd.f32 %v526, %v577
  %v594 = vadd.f32 %v527, %v578
  %v595 = vadd.f32 %v528, %v579
  %v596 = vadd.f32 %v529, %v580
  %v597 = vld [vmem:[#allocation2] sm:$0xff]
  %v598 = vpack.c.bf16 %v581, %v581
  %v599 = vpack.c.bf16 %v582, %v582
  %v600 = vpack.c.bf16 %v583, %v583
  %v601 = vpack.c.bf16 %v584, %v584
  %v602 = vpack.c.bf16 %v585, %v585
  %v603 = vpack.c.bf16 %v586, %v586
  %v604 = vpack.c.bf16 %v587, %v587
  %v605 = vpack.c.bf16 %v588, %v588
  %v606 = vpack.c.bf16 %v589, %v589
  %v607 = vpack.c.bf16 %v590, %v590
  %v608 = vpack.c.bf16 %v591, %v591
  %v609 = vpack.c.bf16 %v592, %v592
  %v610 = vpack.c.bf16 %v593, %v593
  %v611 = vpack.c.bf16 %v594, %v594
  %v612 = vpack.c.bf16 %v595, %v595
  %v613 = vpack.c.bf16 %v596, %v596
  %v614 = vld [vmem:[%s1] sm:$0xf]
  %v615 = vld [vmem:[%s1 + $0x4] sm:$0xf]
  %v616 = vld [vmem:[%s1 + $0x8] sm:$0xf]
  %v617 = vld [vmem:[%s1 + $0xc] sm:$0xf]
  %v618 = vld [vmem:[%s1 + $0x10] sm:$0xf]
  %v619 = vld [vmem:[%s1 + $0x14] sm:$0xf]
  %v620 = vld [vmem:[%s1 + $0x18] sm:$0xf]
  %v621 = vld [vmem:[%s1 + $0x1c] sm:$0xf]
  %v622 = vld [vmem:[%s1 + $0x20] sm:$0xf]
  %v623 = vld [vmem:[%s1 + $0x24] sm:$0xf]
  %v624 = vld [vmem:[%s1 + $0x28] sm:$0xf]
  %v625 = vld [vmem:[%s1 + $0x2c] sm:$0xf]
  %v626 = vld [vmem:[%s1 + $0x30] sm:$0xf]
  %v627 = vld [vmem:[%s1 + $0x34] sm:$0xf]
  %v628 = vld [vmem:[%s1 + $0x38] sm:$0xf]
  %v629 = vld [vmem:[%s1 + $0x3c] sm:$0xf]
  %v630 = vld [vmem:[%s1 + $0x40] sm:$0xf]
  %v631 = vld [vmem:[%s1 + $0x44] sm:$0xf]
  %v632 = vld [vmem:[%s1 + $0x48] sm:$0xf]
  %v633 = vld [vmem:[%s1 + $0x4c] sm:$0xf]
  %v634 = vld [vmem:[%s1 + $0x50] sm:$0xf]
  %v635 = vld [vmem:[%s1 + $0x54] sm:$0xf]
  %v636 = vld [vmem:[%s1 + $0x58] sm:$0xf]
  %v637 = vld [vmem:[%s1 + $0x5c] sm:$0xf]
  %v638 = vld [vmem:[%s1 + $0x60] sm:$0xf]
  %v639 = vld [vmem:[%s1 + $0x64] sm:$0xf]
  %v640 = vld [vmem:[%s1 + $0x68] sm:$0xf]
  %v641 = vld [vmem:[%s1 + $0x6c] sm:$0xf]
  %v642 = vld [vmem:[%s1 + $0x70] sm:$0xf]
  %v643 = vld [vmem:[%s1 + $0x74] sm:$0xf]
  %v644 = vld [vmem:[%s1 + $0x78] sm:$0xf]
  %v645 = vld [vmem:[%s1 + $0x7c] sm:$0xf]
  %v646 = vld [vmem:[%s1 + $0x80] sm:$0xf]
  %v647 = vld [vmem:[%s1 + $0x84] sm:$0xf]
  %v648 = vld [vmem:[%s1 + $0x88] sm:$0xf]
  %v649 = vld [vmem:[%s1 + $0x8c] sm:$0xf]
  %v650 = vld [vmem:[%s1 + $0x90] sm:$0xf]
  %v651 = vld [vmem:[%s1 + $0x94] sm:$0xf]
  %v652 = vld [vmem:[%s1 + $0x98] sm:$0xf]
  %v653 = vld [vmem:[%s1 + $0x9c] sm:$0xf]
  %v654 = vld [vmem:[%s1 + $0xa0] sm:$0xf]
  %v655 = vld [vmem:[%s1 + $0xa4] sm:$0xf]
  %v656 = vld [vmem:[%s1 + $0xa8] sm:$0xf]
  %v657 = vld [vmem:[%s1 + $0xac] sm:$0xf]
  %v658 = vld [vmem:[%s1 + $0xb0] sm:$0xf]
  %v659 = vld [vmem:[%s1 + $0xb4] sm:$0xf]
  %v660 = vld [vmem:[%s1 + $0xb8] sm:$0xf]
  %v661 = vld [vmem:[%s1 + $0xbc] sm:$0xf]
  %v662 = vld [vmem:[%s1 + $0xc0] sm:$0xf]
  %v663 = vld [vmem:[%s1 + $0xc4] sm:$0xf]
  %v664 = vld [vmem:[%s1 + $0xc8] sm:$0xf]
  %v665 = vld [vmem:[%s1 + $0xcc] sm:$0xf]
  %v666 = vld [vmem:[%s1 + $0xd0] sm:$0xf]
  %v667 = vld [vmem:[%s1 + $0xd4] sm:$0xf]
  %v668 = vld [vmem:[%s1 + $0xd8] sm:$0xf]
  %v669 = vld [vmem:[%s1 + $0xdc] sm:$0xf]
  %v670 = vld [vmem:[%s1 + $0xe0] sm:$0xf]
  %v671 = vld [vmem:[%s1 + $0xe4] sm:$0xf]
  %v672 = vld [vmem:[%s1 + $0xe8] sm:$0xf]
  %v673 = vld [vmem:[%s1 + $0xec] sm:$0xf]
  %v674 = vld [vmem:[%s1 + $0xf0] sm:$0xf]
  %v675 = vld [vmem:[%s1 + $0xf4] sm:$0xf]
  %v676 = vld [vmem:[%s1 + $0xf8] sm:$0xf]
  %v677 = vld [vmem:[%s1 + $0xfc] sm:$0xf]
  %v678 = vld [vmem:[%s1 + $0x100] sm:$0xf]
  %v679 = vld [vmem:[%s1 + $0x104] sm:$0xf]
  %v680 = vld [vmem:[%s1 + $0x108] sm:$0xf]
  %v681 = vld [vmem:[%s1 + $0x10c] sm:$0xf]
  %v682 = vld [vmem:[%s1 + $0x110] sm:$0xf]
  %v683 = vld [vmem:[%s1 + $0x114] sm:$0xf]
  %v684 = vld [vmem:[%s1 + $0x118] sm:$0xf]
  %v685 = vld [vmem:[%s1 + $0x11c] sm:$0xf]
  %v686 = vld [vmem:[%s1 + $0x120] sm:$0xf]
  %v687 = vld [vmem:[%s1 + $0x124] sm:$0xf]
  %v688 = vld [vmem:[%s1 + $0x128] sm:$0xf]
  %v689 = vld [vmem:[%s1 + $0x12c] sm:$0xf]
  %v690 = vld [vmem:[%s1 + $0x130] sm:$0xf]
  %v691 = vld [vmem:[%s1 + $0x134] sm:$0xf]
  %v692 = vld [vmem:[%s1 + $0x138] sm:$0xf]
  %v693 = vld [vmem:[%s1 + $0x13c] sm:$0xf]
  %v694 = vld [vmem:[%s1 + $0x140] sm:$0xf]
  %v695 = vld [vmem:[%s1 + $0x144] sm:$0xf]
  %v696 = vld [vmem:[%s1 + $0x148] sm:$0xf]
  %v697 = vld [vmem:[%s1 + $0x14c] sm:$0xf]
  %v698 = vld [vmem:[%s1 + $0x150] sm:$0xf]
  %v699 = vld [vmem:[%s1 + $0x154] sm:$0xf]
  %v700 = vld [vmem:[%s1 + $0x158] sm:$0xf]
  %v701 = vld [vmem:[%s1 + $0x15c] sm:$0xf]
  %v702 = vld [vmem:[%s1 + $0x160] sm:$0xf]
  %v703 = vld [vmem:[%s1 + $0x164] sm:$0xf]
  %v704 = vld [vmem:[%s1 + $0x168] sm:$0xf]
  %v705 = vld [vmem:[%s1 + $0x16c] sm:$0xf]
  %v706 = vld [vmem:[%s1 + $0x170] sm:$0xf]
  %v707 = vld [vmem:[%s1 + $0x174] sm:$0xf]
  %v708 = vld [vmem:[%s1 + $0x178] sm:$0xf]
  %v709 = vld [vmem:[%s1 + $0x17c] sm:$0xf]
  %v710 = vld [vmem:[%s1 + $0x180] sm:$0xf]
  %v711 = vld [vmem:[%s1 + $0x184] sm:$0xf]
  %v712 = vld [vmem:[%s1 + $0x188] sm:$0xf]
  %v713 = vld [vmem:[%s1 + $0x18c] sm:$0xf]
  %v714 = vld [vmem:[%s1 + $0x190] sm:$0xf]
  %v715 = vld [vmem:[%s1 + $0x194] sm:$0xf]
  %v716 = vld [vmem:[%s1 + $0x198] sm:$0xf]
  %v717 = vld [vmem:[%s1 + $0x19c] sm:$0xf]
  %v718 = vld [vmem:[%s1 + $0x1a0] sm:$0xf]
  %v719 = vld [vmem:[%s1 + $0x1a4] sm:$0xf]
  %v720 = vld [vmem:[%s1 + $0x1a8] sm:$0xf]
  %v721 = vld [vmem:[%s1 + $0x1ac] sm:$0xf]
  %v722 = vld [vmem:[%s1 + $0x1b0] sm:$0xf]
  %v723 = vld [vmem:[%s1 + $0x1b4] sm:$0xf]
  %v724 = vld [vmem:[%s1 + $0x1b8] sm:$0xf]
  %v725 = vld [vmem:[%s1 + $0x1bc] sm:$0xf]
  %v726 = vld [vmem:[%s1 + $0x1c0] sm:$0xf]
  %v727 = vld [vmem:[%s1 + $0x1c4] sm:$0xf]
  %v728 = vld [vmem:[%s1 + $0x1c8] sm:$0xf]
  %v729 = vld [vmem:[%s1 + $0x1cc] sm:$0xf]
  %v730 = vld [vmem:[%s1 + $0x1d0] sm:$0xf]
  %v731 = vld [vmem:[%s1 + $0x1d4] sm:$0xf]
  %v732 = vld [vmem:[%s1 + $0x1d8] sm:$0xf]
  %v733 = vld [vmem:[%s1 + $0x1dc] sm:$0xf]
  %v734 = vld [vmem:[%s1 + $0x1e0] sm:$0xf]
  %v735 = vld [vmem:[%s1 + $0x1e4] sm:$0xf]
  %v736 = vld [vmem:[%s1 + $0x1e8] sm:$0xf]
  %v737 = vld [vmem:[%s1 + $0x1ec] sm:$0xf]
  %v738 = vld [vmem:[%s1 + $0x1f0] sm:$0xf]
  %v739 = vld [vmem:[%s1 + $0x1f4] sm:$0xf]
  %v740 = vld [vmem:[%s1 + $0x1f8] sm:$0xf]
  %v741 = vld [vmem:[%s1 + $0x1fc] sm:$0xf]
  %v742 = vld [vmem:[%s1 + $0x200] sm:$0xf]
  %v743 = vld [vmem:[%s1 + $0x204] sm:$0xf]
  %v744 = vld [vmem:[%s1 + $0x208] sm:$0xf]
  %v745 = vld [vmem:[%s1 + $0x20c] sm:$0xf]
  %v746 = vld [vmem:[%s1 + $0x210] sm:$0xf]
  %v747 = vld [vmem:[%s1 + $0x214] sm:$0xf]
  %v748 = vld [vmem:[%s1 + $0x218] sm:$0xf]
  %v749 = vld [vmem:[%s1 + $0x21c] sm:$0xf]
  %v750 = vld [vmem:[%s1 + $0x220] sm:$0xf]
  %v751 = vld [vmem:[%s1 + $0x224] sm:$0xf]
  %v752 = vld [vmem:[%s1 + $0x228] sm:$0xf]
  %v753 = vld [vmem:[%s1 + $0x22c] sm:$0xf]
  %v754 = vld [vmem:[%s1 + $0x230] sm:$0xf]
  %v755 = vld [vmem:[%s1 + $0x234] sm:$0xf]
  %v756 = vld [vmem:[%s1 + $0x238] sm:$0xf]
  %v757 = vld [vmem:[%s1 + $0x23c] sm:$0xf]
  %v758 = vld [vmem:[%s1 + $0x240] sm:$0xf]
  %v759 = vld [vmem:[%s1 + $0x244] sm:$0xf]
  %v760 = vld [vmem:[%s1 + $0x248] sm:$0xf]
  %v761 = vld [vmem:[%s1 + $0x24c] sm:$0xf]
  %v762 = vld [vmem:[%s1 + $0x250] sm:$0xf]
  %v763 = vld [vmem:[%s1 + $0x254] sm:$0xf]
  %v764 = vld [vmem:[%s1 + $0x258] sm:$0xf]
  %v765 = vld [vmem:[%s1 + $0x25c] sm:$0xf]
  %v766 = vld [vmem:[%s1 + $0x260] sm:$0xf]
  %v767 = vld [vmem:[%s1 + $0x264] sm:$0xf]
  %v768 = vld [vmem:[%s1 + $0x268] sm:$0xf]
  %v769 = vld [vmem:[%s1 + $0x26c] sm:$0xf]
  %v770 = vld [vmem:[%s1 + $0x270] sm:$0xf]
  %v771 = vld [vmem:[%s1 + $0x274] sm:$0xf]
  %v772 = vld [vmem:[%s1 + $0x278] sm:$0xf]
  %v773 = vld [vmem:[%s1 + $0x27c] sm:$0xf]
  %v774 = vld [vmem:[%s1 + $0x280] sm:$0xf]
  %v775 = vld [vmem:[%s1 + $0x284] sm:$0xf]
  %v776 = vld [vmem:[%s1 + $0x288] sm:$0xf]
  %v777 = vld [vmem:[%s1 + $0x28c] sm:$0xf]
  %v778 = vld [vmem:[%s1 + $0x290] sm:$0xf]
  %v779 = vld [vmem:[%s1 + $0x294] sm:$0xf]
  %v780 = vld [vmem:[%s1 + $0x298] sm:$0xf]
  %v781 = vld [vmem:[%s1 + $0x29c] sm:$0xf]
  %v782 = vld [vmem:[%s1 + $0x2a0] sm:$0xf]
  %v783 = vld [vmem:[%s1 + $0x2a4] sm:$0xf]
  %v784 = vld [vmem:[%s1 + $0x2a8] sm:$0xf]
  %v785 = vld [vmem:[%s1 + $0x2ac] sm:$0xf]
  %v786 = vld [vmem:[%s1 + $0x2b0] sm:$0xf]
  %v787 = vld [vmem:[%s1 + $0x2b4] sm:$0xf]
  %v788 = vld [vmem:[%s1 + $0x2b8] sm:$0xf]
  %v789 = vld [vmem:[%s1 + $0x2bc] sm:$0xf]
  %v790 = vld [vmem:[%s1 + $0x2c0] sm:$0xf]
  %v791 = vld [vmem:[%s1 + $0x2c4] sm:$0xf]
  %v792 = vld [vmem:[%s1 + $0x2c8] sm:$0xf]
  %v793 = vld [vmem:[%s1 + $0x2cc] sm:$0xf]
  %v794 = vld [vmem:[%s1 + $0x2d0] sm:$0xf]
  %v795 = vld [vmem:[%s1 + $0x2d4] sm:$0xf]
  %v796 = vld [vmem:[%s1 + $0x2d8] sm:$0xf]
  %v797 = vld [vmem:[%s1 + $0x2dc] sm:$0xf]
  %v798 = vld [vmem:[%s1 + $0x2e0] sm:$0xf]
  %v799 = vld [vmem:[%s1 + $0x2e4] sm:$0xf]
  %v800 = vld [vmem:[%s1 + $0x2e8] sm:$0xf]
  %v801 = vld [vmem:[%s1 + $0x2ec] sm:$0xf]
  %v802 = vld [vmem:[%s1 + $0x2f0] sm:$0xf]
  %v803 = vld [vmem:[%s1 + $0x2f4] sm:$0xf]
  %v804 = vld [vmem:[%s1 + $0x2f8] sm:$0xf]
  %v805 = vld [vmem:[%s1 + $0x2fc] sm:$0xf]
  %v806 = vld [vmem:[%s1 + $0x300] sm:$0xf]
  %v807 = vld [vmem:[%s1 + $0x304] sm:$0xf]
  %v808 = vld [vmem:[%s1 + $0x308] sm:$0xf]
  %v809 = vld [vmem:[%s1 + $0x30c] sm:$0xf]
  %v810 = vld [vmem:[%s1 + $0x310] sm:$0xf]
  %v811 = vld [vmem:[%s1 + $0x314] sm:$0xf]
  %v812 = vld [vmem:[%s1 + $0x318] sm:$0xf]
  %v813 = vld [vmem:[%s1 + $0x31c] sm:$0xf]
  %v814 = vld [vmem:[%s1 + $0x320] sm:$0xf]
  %v815 = vld [vmem:[%s1 + $0x324] sm:$0xf]
  %v816 = vld [vmem:[%s1 + $0x328] sm:$0xf]
  %v817 = vld [vmem:[%s1 + $0x32c] sm:$0xf]
  %v818 = vld [vmem:[%s1 + $0x330] sm:$0xf]
  %v819 = vld [vmem:[%s1 + $0x334] sm:$0xf]
  %v820 = vld [vmem:[%s1 + $0x338] sm:$0xf]
  %v821 = vld [vmem:[%s1 + $0x33c] sm:$0xf]
  %v822 = vld [vmem:[%s1 + $0x340] sm:$0xf]
  %v823 = vld [vmem:[%s1 + $0x344] sm:$0xf]
  %v824 = vld [vmem:[%s1 + $0x348] sm:$0xf]
  %v825 = vld [vmem:[%s1 + $0x34c] sm:$0xf]
  %v826 = vld [vmem:[%s1 + $0x350] sm:$0xf]
  %v827 = vld [vmem:[%s1 + $0x354] sm:$0xf]
  %v828 = vld [vmem:[%s1 + $0x358] sm:$0xf]
  %v829 = vld [vmem:[%s1 + $0x35c] sm:$0xf]
  %v830 = vld [vmem:[%s1 + $0x360] sm:$0xf]
  %v831 = vld [vmem:[%s1 + $0x364] sm:$0xf]
  %v832 = vld [vmem:[%s1 + $0x368] sm:$0xf]
  %v833 = vld [vmem:[%s1 + $0x36c] sm:$0xf]
  %v834 = vld [vmem:[%s1 + $0x370] sm:$0xf]
  %v835 = vld [vmem:[%s1 + $0x374] sm:$0xf]
  %v836 = vld [vmem:[%s1 + $0x378] sm:$0xf]
  %v837 = vld [vmem:[%s1 + $0x37c] sm:$0xf]
  %v838 = vld [vmem:[%s1 + $0x380] sm:$0xf]
  %v839 = vld [vmem:[%s1 + $0x384] sm:$0xf]
  %v840 = vld [vmem:[%s1 + $0x388] sm:$0xf]
  %v841 = vld [vmem:[%s1 + $0x38c] sm:$0xf]
  %v842 = vld [vmem:[%s1 + $0x390] sm:$0xf]
  %v843 = vld [vmem:[%s1 + $0x394] sm:$0xf]
  %v844 = vld [vmem:[%s1 + $0x398] sm:$0xf]
  %v845 = vld [vmem:[%s1 + $0x39c] sm:$0xf]
  %v846 = vld [vmem:[%s1 + $0x3a0] sm:$0xf]
  %v847 = vld [vmem:[%s1 + $0x3a4] sm:$0xf]
  %v848 = vld [vmem:[%s1 + $0x3a8] sm:$0xf]
  %v849 = vld [vmem:[%s1 + $0x3ac] sm:$0xf]
  %v850 = vld [vmem:[%s1 + $0x3b0] sm:$0xf]
  %v851 = vld [vmem:[%s1 + $0x3b4] sm:$0xf]
  %v852 = vld [vmem:[%s1 + $0x3b8] sm:$0xf]
  %v853 = vld [vmem:[%s1 + $0x3bc] sm:$0xf]
  %v854 = vld [vmem:[%s1 + $0x3c0] sm:$0xf]
  %v855 = vld [vmem:[%s1 + $0x3c4] sm:$0xf]
  %v856 = vld [vmem:[%s1 + $0x3c8] sm:$0xf]
  %v857 = vld [vmem:[%s1 + $0x3cc] sm:$0xf]
  %v858 = vld [vmem:[%s1 + $0x3d0] sm:$0xf]
  %v859 = vld [vmem:[%s1 + $0x3d4] sm:$0xf]
  %v860 = vld [vmem:[%s1 + $0x3d8] sm:$0xf]
  %v861 = vld [vmem:[%s1 + $0x3dc] sm:$0xf]
  %v862 = vld [vmem:[%s1 + $0x3e0] sm:$0xf]
  %v863 = vld [vmem:[%s1 + $0x3e4] sm:$0xf]
  %v864 = vld [vmem:[%s1 + $0x3e8] sm:$0xf]
  %v865 = vld [vmem:[%s1 + $0x3ec] sm:$0xf]
  %v866 = vld [vmem:[%s1 + $0x3f0] sm:$0xf]
  %v867 = vld [vmem:[%s1 + $0x3f4] sm:$0xf]
  %v868 = vld [vmem:[%s1 + $0x3f8] sm:$0xf]
  %v869 = vld [vmem:[%s1 + $0x3fc] sm:$0xf]
  %v1126 = vunpack.c.l.b16 %v614
  %v1127 = vunpack.c.l.b16 %v615
  %v1128 = vunpack.c.l.b16 %v616
  %v1129 = vunpack.c.l.b16 %v617
  %v1130 = vunpack.c.l.b16 %v618
  %v1131 = vunpack.c.l.b16 %v619
  %v1132 = vunpack.c.l.b16 %v620
  %v1133 = vunpack.c.l.b16 %v621
  %v1134 = vunpack.c.l.b16 %v622
  %v1135 = vunpack.c.l.b16 %v623
  %v1136 = vunpack.c.l.b16 %v624
  %v1137 = vunpack.c.l.b16 %v625
  %v1138 = vunpack.c.l.b16 %v626
  %v1139 = vunpack.c.l.b16 %v627
  %v1140 = vunpack.c.l.b16 %v628
  %v1141 = vunpack.c.l.b16 %v629
  %v1142 = vunpack.c.l.b16 %v630
  %v1143 = vunpack.c.l.b16 %v631
  %v1144 = vunpack.c.l.b16 %v632
  %v1145 = vunpack.c.l.b16 %v633
  %v1146 = vunpack.c.l.b16 %v634
  %v1147 = vunpack.c.l.b16 %v635
  %v1148 = vunpack.c.l.b16 %v636
  %v1149 = vunpack.c.l.b16 %v637
  %v1150 = vunpack.c.l.b16 %v638
  %v1151 = vunpack.c.l.b16 %v639
  %v1152 = vunpack.c.l.b16 %v640
  %v1153 = vunpack.c.l.b16 %v641
  %v1154 = vunpack.c.l.b16 %v642
  %v1155 = vunpack.c.l.b16 %v643
  %v1156 = vunpack.c.l.b16 %v644
  %v1157 = vunpack.c.l.b16 %v645
  %v1158 = vunpack.c.l.b16 %v646
  %v1159 = vunpack.c.l.b16 %v647
  %v1160 = vunpack.c.l.b16 %v648
  %v1161 = vunpack.c.l.b16 %v649
  %v1162 = vunpack.c.l.b16 %v650
  %v1163 = vunpack.c.l.b16 %v651
  %v1164 = vunpack.c.l.b16 %v652
  %v1165 = vunpack.c.l.b16 %v653
  %v1166 = vunpack.c.l.b16 %v654
  %v1167 = vunpack.c.l.b16 %v655
  %v1168 = vunpack.c.l.b16 %v656
  %v1169 = vunpack.c.l.b16 %v657
  %v1170 = vunpack.c.l.b16 %v658
  %v1171 = vunpack.c.l.b16 %v659
  %v1172 = vunpack.c.l.b16 %v660
  %v1173 = vunpack.c.l.b16 %v661
  %v1174 = vunpack.c.l.b16 %v662
  %v1175 = vunpack.c.l.b16 %v663
  %v1176 = vunpack.c.l.b16 %v664
  %v1177 = vunpack.c.l.b16 %v665
  %v1178 = vunpack.c.l.b16 %v666
  %v1179 = vunpack.c.l.b16 %v667
  %v1180 = vunpack.c.l.b16 %v668
  %v1181 = vunpack.c.l.b16 %v669
  %v1182 = vunpack.c.l.b16 %v670
  %v1183 = vunpack.c.l.b16 %v671
  %v1184 = vunpack.c.l.b16 %v672
  %v1185 = vunpack.c.l.b16 %v673
  %v1186 = vunpack.c.l.b16 %v674
  %v1187 = vunpack.c.l.b16 %v675
  %v1188 = vunpack.c.l.b16 %v676
  %v1189 = vunpack.c.l.b16 %v677
  %v1190 = vunpack.c.l.b16 %v678
  %v1191 = vunpack.c.l.b16 %v679
  %v1192 = vunpack.c.l.b16 %v680
  %v1193 = vunpack.c.l.b16 %v681
  %v1194 = vunpack.c.l.b16 %v682
  %v1195 = vunpack.c.l.b16 %v683
  %v1196 = vunpack.c.l.b16 %v684
  %v1197 = vunpack.c.l.b16 %v685
  %v1198 = vunpack.c.l.b16 %v686
  %v1199 = vunpack.c.l.b16 %v687
  %v1200 = vunpack.c.l.b16 %v688
  %v1201 = vunpack.c.l.b16 %v689
  %v1202 = vunpack.c.l.b16 %v690
  %v1203 = vunpack.c.l.b16 %v691
  %v1204 = vunpack.c.l.b16 %v692
  %v1205 = vunpack.c.l.b16 %v693
  %v1206 = vunpack.c.l.b16 %v694
  %v1207 = vunpack.c.l.b16 %v695
  %v1208 = vunpack.c.l.b16 %v696
  %v1209 = vunpack.c.l.b16 %v697
  %v1210 = vunpack.c.l.b16 %v698
  %v1211 = vunpack.c.l.b16 %v699
  %v1212 = vunpack.c.l.b16 %v700
  %v1213 = vunpack.c.l.b16 %v701
  %v1214 = vunpack.c.l.b16 %v702
  %v1215 = vunpack.c.l.b16 %v703
  %v1216 = vunpack.c.l.b16 %v704
  %v1217 = vunpack.c.l.b16 %v705
  %v1218 = vunpack.c.l.b16 %v706
  %v1219 = vunpack.c.l.b16 %v707
  %v1220 = vunpack.c.l.b16 %v708
  %v1221 = vunpack.c.l.b16 %v709
  %v1222 = vunpack.c.l.b16 %v710
  %v1223 = vunpack.c.l.b16 %v711
  %v1224 = vunpack.c.l.b16 %v712
  %v1225 = vunpack.c.l.b16 %v713
  %v1226 = vunpack.c.l.b16 %v714
  %v1227 = vunpack.c.l.b16 %v715
  %v1228 = vunpack.c.l.b16 %v716
  %v1229 = vunpack.c.l.b16 %v717
  %v1230 = vunpack.c.l.b16 %v718
  %v1231 = vunpack.c.l.b16 %v719
  %v1232 = vunpack.c.l.b16 %v720
  %v1233 = vunpack.c.l.b16 %v721
  %v1234 = vunpack.c.l.b16 %v722
  %v1235 = vunpack.c.l.b16 %v723
  %v1236 = vunpack.c.l.b16 %v724
  %v1237 = vunpack.c.l.b16 %v725
  %v1238 = vunpack.c.l.b16 %v726
  %v1239 = vunpack.c.l.b16 %v727
  %v1240 = vunpack.c.l.b16 %v728
  %v1241 = vunpack.c.l.b16 %v729
  %v1242 = vunpack.c.l.b16 %v730
  %v1243 = vunpack.c.l.b16 %v731
  %v1244 = vunpack.c.l.b16 %v732
  %v1245 = vunpack.c.l.b16 %v733
  %v1246 = vunpack.c.l.b16 %v734
  %v1247 = vunpack.c.l.b16 %v735
  %v1248 = vunpack.c.l.b16 %v736
  %v1249 = vunpack.c.l.b16 %v737
  %v1250 = vunpack.c.l.b16 %v738
  %v1251 = vunpack.c.l.b16 %v739
  %v1252 = vunpack.c.l.b16 %v740
  %v1253 = vunpack.c.l.b16 %v741
  %v1254 = vunpack.c.l.b16 %v742
  %v1255 = vunpack.c.l.b16 %v743
  %v1256 = vunpack.c.l.b16 %v744
  %v1257 = vunpack.c.l.b16 %v745
  %v1258 = vunpack.c.l.b16 %v746
  %v1259 = vunpack.c.l.b16 %v747
  %v1260 = vunpack.c.l.b16 %v748
  %v1261 = vunpack.c.l.b16 %v749
  %v1262 = vunpack.c.l.b16 %v750
  %v1263 = vunpack.c.l.b16 %v751
  %v1264 = vunpack.c.l.b16 %v752
  %v1265 = vunpack.c.l.b16 %v753
  %v1266 = vunpack.c.l.b16 %v754
  %v1267 = vunpack.c.l.b16 %v755
  %v1268 = vunpack.c.l.b16 %v756
  %v1269 = vunpack.c.l.b16 %v757
  %v1270 = vunpack.c.l.b16 %v758
  %v1271 = vunpack.c.l.b16 %v759
  %v1272 = vunpack.c.l.b16 %v760
  %v1273 = vunpack.c.l.b16 %v761
  %v1274 = vunpack.c.l.b16 %v762
  %v1275 = vunpack.c.l.b16 %v763
  %v1276 = vunpack.c.l.b16 %v764
  %v1277 = vunpack.c.l.b16 %v765
  %v1278 = vunpack.c.l.b16 %v766
  %v1279 = vunpack.c.l.b16 %v767
  %v1280 = vunpack.c.l.b16 %v768
  %v1281 = vunpack.c.l.b16 %v769
  %v1282 = vunpack.c.l.b16 %v770
  %v1283 = vunpack.c.l.b16 %v771
  %v1284 = vunpack.c.l.b16 %v772
  %v1285 = vunpack.c.l.b16 %v773
  %v1286 = vunpack.c.l.b16 %v774
  %v1287 = vunpack.c.l.b16 %v775
  %v1288 = vunpack.c.l.b16 %v776
  %v1289 = vunpack.c.l.b16 %v777
  %v1290 = vunpack.c.l.b16 %v778
  %v1291 = vunpack.c.l.b16 %v779
  %v1292 = vunpack.c.l.b16 %v780
  %v1293 = vunpack.c.l.b16 %v781
  %v1294 = vunpack.c.l.b16 %v782
  %v1295 = vunpack.c.l.b16 %v783
  %v1296 = vunpack.c.l.b16 %v784
  %v1297 = vunpack.c.l.b16 %v785
  %v1298 = vunpack.c.l.b16 %v786
  %v1299 = vunpack.c.l.b16 %v787
  %v1300 = vunpack.c.l.b16 %v788
  %v1301 = vunpack.c.l.b16 %v789
  %v1302 = vunpack.c.l.b16 %v790
  %v1303 = vunpack.c.l.b16 %v791
  %v1304 = vunpack.c.l.b16 %v792
  %v1305 = vunpack.c.l.b16 %v793
  %v1306 = vunpack.c.l.b16 %v794
  %v1307 = vunpack.c.l.b16 %v795
  %v1308 = vunpack.c.l.b16 %v796
  %v1309 = vunpack.c.l.b16 %v797
  %v1310 = vunpack.c.l.b16 %v798
  %v1311 = vunpack.c.l.b16 %v799
  %v1312 = vunpack.c.l.b16 %v800
  %v1313 = vunpack.c.l.b16 %v801
  %v1314 = vunpack.c.l.b16 %v802
  %v1315 = vunpack.c.l.b16 %v803
  %v1316 = vunpack.c.l.b16 %v804
  %v1317 = vunpack.c.l.b16 %v805
  %v1318 = vunpack.c.l.b16 %v806
  %v1319 = vunpack.c.l.b16 %v807
  %v1320 = vunpack.c.l.b16 %v808
  %v1321 = vunpack.c.l.b16 %v809
  %v1322 = vunpack.c.l.b16 %v810
  %v1323 = vunpack.c.l.b16 %v811
  %v1324 = vunpack.c.l.b16 %v812
  %v1325 = vunpack.c.l.b16 %v813
  %v1326 = vunpack.c.l.b16 %v814
  %v1327 = vunpack.c.l.b16 %v815
  %v1328 = vunpack.c.l.b16 %v816
  %v1329 = vunpack.c.l.b16 %v817
  %v1330 = vunpack.c.l.b16 %v818
  %v1331 = vunpack.c.l.b16 %v819
  %v1332 = vunpack.c.l.b16 %v820
  %v1333 = vunpack.c.l.b16 %v821
  %v1334 = vunpack.c.l.b16 %v822
  %v1335 = vunpack.c.l.b16 %v823
  %v1336 = vunpack.c.l.b16 %v824
  %v1337 = vunpack.c.l.b16 %v825
  %v1338 = vunpack.c.l.b16 %v826
  %v1339 = vunpack.c.l.b16 %v827
  %v1340 = vunpack.c.l.b16 %v828
  %v1341 = vunpack.c.l.b16 %v829
  %v1342 = vunpack.c.l.b16 %v830
  %v1343 = vunpack.c.l.b16 %v831
  %v1344 = vunpack.c.l.b16 %v832
  %v1345 = vunpack.c.l.b16 %v833
  %v1346 = vunpack.c.l.b16 %v834
  %v1347 = vunpack.c.l.b16 %v835
  %v1348 = vunpack.c.l.b16 %v836
  %v1349 = vunpack.c.l.b16 %v837
  %v1350 = vunpack.c.l.b16 %v838
  %v1351 = vunpack.c.l.b16 %v839
  %v1352 = vunpack.c.l.b16 %v840
  %v1353 = vunpack.c.l.b16 %v841
  %v1354 = vunpack.c.l.b16 %v842
  %v1355 = vunpack.c.l.b16 %v843
  %v1356 = vunpack.c.l.b16 %v844
  %v1357 = vunpack.c.l.b16 %v845
  %v1358 = vunpack.c.l.b16 %v846
  %v1359 = vunpack.c.l.b16 %v847
  %v1360 = vunpack.c.l.b16 %v848
  %v1361 = vunpack.c.l.b16 %v849
  %v1362 = vunpack.c.l.b16 %v850
  %v1363 = vunpack.c.l.b16 %v851
  %v1364 = vunpack.c.l.b16 %v852
  %v1365 = vunpack.c.l.b16 %v853
  %v1366 = vunpack.c.l.b16 %v854
  %v1367 = vunpack.c.l.b16 %v855
  %v1368 = vunpack.c.l.b16 %v856
  %v1369 = vunpack.c.l.b16 %v857
  %v1370 = vunpack.c.l.b16 %v858
  %v1371 = vunpack.c.l.b16 %v859
  %v1372 = vunpack.c.l.b16 %v860
  %v1373 = vunpack.c.l.b16 %v861
  %v1374 = vunpack.c.l.b16 %v862
  %v1375 = vunpack.c.l.b16 %v863
  %v1376 = vunpack.c.l.b16 %v864
  %v1377 = vunpack.c.l.b16 %v865
  %v1378 = vunpack.c.l.b16 %v866
  %v1379 = vunpack.c.l.b16 %v867
  %v1380 = vunpack.c.l.b16 %v868
  %v1381 = vunpack.c.l.b16 %v869
  %v1382 = vpack.c.b16 %v1127, %v1126
  %v1383 = vpack.c.b16 %v1129, %v1128
  %v1384 = vpack.c.b16 %v1131, %v1130
  %v1385 = vpack.c.b16 %v1133, %v1132
  %v1386 = vpack.c.b16 %v1135, %v1134
  %v1387 = vpack.c.b16 %v1137, %v1136
  %v1388 = vpack.c.b16 %v1139, %v1138
  %v1389 = vpack.c.b16 %v1141, %v1140
  %v1390 = vpack.c.b16 %v1143, %v1142
  %v1391 = vpack.c.b16 %v1145, %v1144
  %v1392 = vpack.c.b16 %v1147, %v1146
  %v1393 = vpack.c.b16 %v1149, %v1148
  %v1394 = vpack.c.b16 %v1151, %v1150
  %v1395 = vpack.c.b16 %v1153, %v1152
  %v1396 = vpack.c.b16 %v1155, %v1154
  %v1397 = vpack.c.b16 %v1157, %v1156
  %v1398 = vpack.c.b16 %v1159, %v1158
  %v1399 = vpack.c.b16 %v1161, %v1160
  %v1400 = vpack.c.b16 %v1163, %v1162
  %v1401 = vpack.c.b16 %v1165, %v1164
  %v1402 = vpack.c.b16 %v1167, %v1166
  %v1403 = vpack.c.b16 %v1169, %v1168
  %v1404 = vpack.c.b16 %v1171, %v1170
  %v1405 = vpack.c.b16 %v1173, %v1172
  %v1406 = vpack.c.b16 %v1175, %v1174
  %v1407 = vpack.c.b16 %v1177, %v1176
  %v1408 = vpack.c.b16 %v1179, %v1178
  %v1409 = vpack.c.b16 %v1181, %v1180
  %v1410 = vpack.c.b16 %v1183, %v1182
  %v1411 = vpack.c.b16 %v1185, %v1184
  %v1412 = vpack.c.b16 %v1187, %v1186
  %v1413 = vpack.c.b16 %v1189, %v1188
  %v1414 = vpack.c.b16 %v1191, %v1190
  %v1415 = vpack.c.b16 %v1193, %v1192
  %v1416 = vpack.c.b16 %v1195, %v1194
  %v1417 = vpack.c.b16 %v1197, %v1196
  %v1418 = vpack.c.b16 %v1199, %v1198
  %v1419 = vpack.c.b16 %v1201, %v1200
  %v1420 = vpack.c.b16 %v1203, %v1202
  %v1421 = vpack.c.b16 %v1205, %v1204
  %v1422 = vpack.c.b16 %v1207, %v1206
  %v1423 = vpack.c.b16 %v1209, %v1208
  %v1424 = vpack.c.b16 %v1211, %v1210
  %v1425 = vpack.c.b16 %v1213, %v1212
  %v1426 = vpack.c.b16 %v1215, %v1214
  %v1427 = vpack.c.b16 %v1217, %v1216
  %v1428 = vpack.c.b16 %v1219, %v1218
  %v1429 = vpack.c.b16 %v1221, %v1220
  %v1430 = vpack.c.b16 %v1223, %v1222
  %v1431 = vpack.c.b16 %v1225, %v1224
  %v1432 = vpack.c.b16 %v1227, %v1226
  %v1433 = vpack.c.b16 %v1229, %v1228
  %v1434 = vpack.c.b16 %v1231, %v1230
  %v1435 = vpack.c.b16 %v1233, %v1232
  %v1436 = vpack.c.b16 %v1235, %v1234
  %v1437 = vpack.c.b16 %v1237, %v1236
  %v1438 = vpack.c.b16 %v1239, %v1238
  %v1439 = vpack.c.b16 %v1241, %v1240
  %v1440 = vpack.c.b16 %v1243, %v1242
  %v1441 = vpack.c.b16 %v1245, %v1244
  %v1442 = vpack.c.b16 %v1247, %v1246
  %v1443 = vpack.c.b16 %v1249, %v1248
  %v1444 = vpack.c.b16 %v1251, %v1250
  %v1445 = vpack.c.b16 %v1253, %v1252
  %v1446 = vpack.c.b16 %v1255, %v1254
  %v1447 = vpack.c.b16 %v1257, %v1256
  %v1448 = vpack.c.b16 %v1259, %v1258
  %v1449 = vpack.c.b16 %v1261, %v1260
  %v1450 = vpack.c.b16 %v1263, %v1262
  %v1451 = vpack.c.b16 %v1265, %v1264
  %v1452 = vpack.c.b16 %v1267, %v1266
  %v1453 = vpack.c.b16 %v1269, %v1268
  %v1454 = vpack.c.b16 %v1271, %v1270
  %v1455 = vpack.c.b16 %v1273, %v1272
  %v1456 = vpack.c.b16 %v1275, %v1274
  %v1457 = vpack.c.b16 %v1277, %v1276
  %v1458 = vpack.c.b16 %v1279, %v1278
  %v1459 = vpack.c.b16 %v1281, %v1280
  %v1460 = vpack.c.b16 %v1283, %v1282
  %v1461 = vpack.c.b16 %v1285, %v1284
  %v1462 = vpack.c.b16 %v1287, %v1286
  %v1463 = vpack.c.b16 %v1289, %v1288
  %v1464 = vpack.c.b16 %v1291, %v1290
  %v1465 = vpack.c.b16 %v1293, %v1292
  %v1466 = vpack.c.b16 %v1295, %v1294
  %v1467 = vpack.c.b16 %v1297, %v1296
  %v1468 = vpack.c.b16 %v1299, %v1298
  %v1469 = vpack.c.b16 %v1301, %v1300
  %v1470 = vpack.c.b16 %v1303, %v1302
  %v1471 = vpack.c.b16 %v1305, %v1304
  %v1472 = vpack.c.b16 %v1307, %v1306
  %v1473 = vpack.c.b16 %v1309, %v1308
  %v1474 = vpack.c.b16 %v1311, %v1310
  %v1475 = vpack.c.b16 %v1313, %v1312
  %v1476 = vpack.c.b16 %v1315, %v1314
  %v1477 = vpack.c.b16 %v1317, %v1316
  %v1478 = vpack.c.b16 %v1319, %v1318
  %v1479 = vpack.c.b16 %v1321, %v1320
  %v1480 = vpack.c.b16 %v1323, %v1322
  %v1481 = vpack.c.b16 %v1325, %v1324
  %v1482 = vpack.c.b16 %v1327, %v1326
  %v1483 = vpack.c.b16 %v1329, %v1328
  %v1484 = vpack.c.b16 %v1331, %v1330
  %v1485 = vpack.c.b16 %v1333, %v1332
  %v1486 = vpack.c.b16 %v1335, %v1334
  %v1487 = vpack.c.b16 %v1337, %v1336
  %v1488 = vpack.c.b16 %v1339, %v1338
  %v1489 = vpack.c.b16 %v1341, %v1340
  %v1490 = vpack.c.b16 %v1343, %v1342
  %v1491 = vpack.c.b16 %v1345, %v1344
  %v1492 = vpack.c.b16 %v1347, %v1346
  %v1493 = vpack.c.b16 %v1349, %v1348
  %v1494 = vpack.c.b16 %v1351, %v1350
  %v1495 = vpack.c.b16 %v1353, %v1352
  %v1496 = vpack.c.b16 %v1355, %v1354
  %v1497 = vpack.c.b16 %v1357, %v1356
  %v1498 = vpack.c.b16 %v1359, %v1358
  %v1499 = vpack.c.b16 %v1361, %v1360
  %v1500 = vpack.c.b16 %v1363, %v1362
  %v1501 = vpack.c.b16 %v1365, %v1364
  %v1502 = vpack.c.b16 %v1367, %v1366
  %v1503 = vpack.c.b16 %v1369, %v1368
  %v1504 = vpack.c.b16 %v1371, %v1370
  %v1505 = vpack.c.b16 %v1373, %v1372
  %v1506 = vpack.c.b16 %v1375, %v1374
  %v1507 = vpack.c.b16 %v1377, %v1376
  %v1508 = vpack.c.b16 %v1379, %v1378
  %v1509 = vpack.c.b16 %v1381, %v1380
  %1638 = vmatprep.subr.bf16.mxu0 0
  %1639 = vmatpush1.bf16.msra.mxu0 %v1382
  %1640 = vmatprep.subr.bf16.mxu0 0
  %1641 = vmatpush1.bf16.msra.mxu0 %v1383
  %1642 = vmatprep.subr.bf16.mxu0 0
  %1643 = vmatpush1.bf16.msra.mxu0 %v1384
  %1644 = vmatprep.subr.bf16.mxu0 0
  %1645 = vmatpush1.bf16.msra.mxu0 %v1385
  %1646 = vmatprep.subr.bf16.mxu0 0
  %1647 = vmatpush1.bf16.msra.mxu0 %v1386
  %1648 = vmatprep.subr.bf16.mxu0 0
  %1649 = vmatpush1.bf16.msra.mxu0 %v1387
  %1650 = vmatprep.subr.bf16.mxu0 0
  %1651 = vmatpush1.bf16.msra.mxu0 %v1388
  %1652 = vmatprep.subr.bf16.mxu0 0
  %1653 = vmatpush1.bf16.msra.mxu0 %v1389
  %1654 = vmatprep.subr.bf16.mxu0 0
  %1655 = vmatpush1.bf16.msra.mxu0 %v1390
  %1656 = vmatprep.subr.bf16.mxu0 0
  %1657 = vmatpush1.bf16.msra.mxu0 %v1391
  %1658 = vmatprep.subr.bf16.mxu0 0
  %1659 = vmatpush1.bf16.msra.mxu0 %v1392
  %1660 = vmatprep.subr.bf16.mxu0 0
  %1661 = vmatpush1.bf16.msra.mxu0 %v1393
  %1662 = vmatprep.subr.bf16.mxu0 0
  %1663 = vmatpush1.bf16.msra.mxu0 %v1394
  %1664 = vmatprep.subr.bf16.mxu0 0
  %1665 = vmatpush1.bf16.msra.mxu0 %v1395
  %1666 = vmatprep.subr.bf16.mxu0 0
  %1667 = vmatpush1.bf16.msra.mxu0 %v1396
  %1668 = vmatprep.subr.bf16.mxu0 0
  %1669 = vmatpush1.bf16.msra.mxu0 %v1397
  %1670 = vmatprep.mubr.bf16.mxu0 %v599
  %1671 = vmatmul.mubr.bf16.gmra.mrb[0].mxu0 %v598
  %v1672 = vpop.f32.mrb[0].mxu0
  %v1673 = vadd.f32 0.0, %v1672
  %v1674 = vpop.f32.mrb[0].mxu0
  %v1675 = vpop.f32.mrb[0].mxu0
  %v1676 = vpop.f32.mrb[0].mxu0
  %1677 = vdwg.mxu0
  %1678 = vmatprep.subr.bf16.mxu0 0
  %1679 = vmatpush1.bf16.msra.mxu0 %v1398
  %1680 = vmatprep.subr.bf16.mxu0 0
  %1681 = vmatpush1.bf16.msra.mxu0 %v1399
  %1682 = vmatprep.subr.bf16.mxu0 0
  %1683 = vmatpush1.bf16.msra.mxu0 %v1400
  %1684 = vmatprep.subr.bf16.mxu0 0
  %1685 = vmatpush1.bf16.msra.mxu0 %v1401
  %1686 = vmatprep.subr.bf16.mxu0 0
  %1687 = vmatpush1.bf16.msra.mxu0 %v1402
  %1688 = vmatprep.subr.bf16.mxu0 0
  %1689 = vmatpush1.bf16.msra.mxu0 %v1403
  %1690 = vmatprep.subr.bf16.mxu0 0
  %1691 = vmatpush1.bf16.msra.mxu0 %v1404
  %1692 = vmatprep.subr.bf16.mxu0 0
  %1693 = vmatpush1.bf16.msra.mxu0 %v1405
  %1694 = vmatprep.subr.bf16.mxu0 0
  %1695 = vmatpush1.bf16.msra.mxu0 %v1406
  %1696 = vmatprep.subr.bf16.mxu0 0
  %1697 = vmatpush1.bf16.msra.mxu0 %v1407
  %1698 = vmatprep.subr.bf16.mxu0 0
  %1699 = vmatpush1.bf16.msra.mxu0 %v1408
  %1700 = vmatprep.subr.bf16.mxu0 0
  %1701 = vmatpush1.bf16.msra.mxu0 %v1409
  %1702 = vmatprep.subr.bf16.mxu0 0
  %1703 = vmatpush1.bf16.msra.mxu0 %v1410
  %1704 = vmatprep.subr.bf16.mxu0 0
  %1705 = vmatpush1.bf16.msra.mxu0 %v1411
  %1706 = vmatprep.subr.bf16.mxu0 0
  %1707 = vmatpush1.bf16.msra.mxu0 %v1412
  %1708 = vmatprep.subr.bf16.mxu0 0
  %1709 = vmatpush1.bf16.msra.mxu0 %v1413
  %1710 = vmatprep.mubr.bf16.mxu0 %v601
  %1711 = vmatmul.mubr.bf16.gmra.mrb[0].mxu0 %v600
  %v1712 = vpop.f32.mrb[0].mxu0
  %v1713 = vadd.f32 %v1673, %v1712
  %v1714 = vpop.f32.mrb[0].mxu0
  %v1715 = vpop.f32.mrb[0].mxu0
  %v1716 = vpop.f32.mrb[0].mxu0
  %1717 = vdwg.mxu0
  %1718 = vmatprep.subr.bf16.mxu0 0
  %1719 = vmatpush1.bf16.msra.mxu0 %v1414
  %1720 = vmatprep.subr.bf16.mxu0 0
  %1721 = vmatpush1.bf16.msra.mxu0 %v1415
  %1722 = vmatprep.subr.bf16.mxu0 0
  %1723 = vmatpush1.bf16.msra.mxu0 %v1416
  %1724 = vmatprep.subr.bf16.mxu0 0
  %1725 = vmatpush1.bf16.msra.mxu0 %v1417
  %1726 = vmatprep.subr.bf16.mxu0 0
  %1727 = vmatpush1.bf16.msra.mxu0 %v1418
  %1728 = vmatprep.subr.bf16.mxu0 0
  %1729 = vmatpush1.bf16.msra.mxu0 %v1419
  %1730 = vmatprep.subr.bf16.mxu0 0
  %1731 = vmatpush1.bf16.msra.mxu0 %v1420
  %1732 = vmatprep.subr.bf16.mxu0 0
  %1733 = vmatpush1.bf16.msra.mxu0 %v1421
  %1734 = vmatprep.subr.bf16.mxu0 0
  %1735 = vmatpush1.bf16.msra.mxu0 %v1422
  %1736 = vmatprep.subr.bf16.mxu0 0
  %1737 = vmatpush1.bf16.msra.mxu0 %v1423
  %1738 = vmatprep.subr.bf16.mxu0 0
  %1739 = vmatpush1.bf16.msra.mxu0 %v1424
  %1740 = vmatprep.subr.bf16.mxu0 0
  %1741 = vmatpush1.bf16.msra.mxu0 %v1425
  %1742 = vmatprep.subr.bf16.mxu0 0
  %1743 = vmatpush1.bf16.msra.mxu0 %v1426
  %1744 = vmatprep.subr.bf16.mxu0 0
  %1745 = vmatpush1.bf16.msra.mxu0 %v1427
  %1746 = vmatprep.subr.bf16.mxu0 0
  %1747 = vmatpush1.bf16.msra.mxu0 %v1428
  %1748 = vmatprep.subr.bf16.mxu0 0
  %1749 = vmatpush1.bf16.msra.mxu0 %v1429
  %1750 = vmatprep.mubr.bf16.mxu0 %v603
  %1751 = vmatmul.mubr.bf16.gmra.mrb[0].mxu0 %v602
  %v1752 = vpop.f32.mrb[0].mxu0
  %v1753 = vadd.f32 %v1713, %v1752
  %v1754 = vpop.f32.mrb[0].mxu0
  %v1755 = vpop.f32.mrb[0].mxu0
  %v1756 = vpop.f32.mrb[0].mxu0
  %1757 = vdwg.mxu0
  %1758 = vmatprep.subr.bf16.mxu0 0
  %1759 = vmatpush1.bf16.msra.mxu0 %v1430
  %1760 = vmatprep.subr.bf16.mxu0 0
  %1761 = vmatpush1.bf16.msra.mxu0 %v1431
  %1762 = vmatprep.subr.bf16.mxu0 0
  %1763 = vmatpush1.bf16.msra.mxu0 %v1432
  %1764 = vmatprep.subr.bf16.mxu0 0
  %1765 = vmatpush1.bf16.msra.mxu0 %v1433
  %1766 = vmatprep.subr.bf16.mxu0 0
  %1767 = vmatpush1.bf16.msra.mxu0 %v1434
  %1768 = vmatprep.subr.bf16.mxu0 0
  %1769 = vmatpush1.bf16.msra.mxu0 %v1435
  %1770 = vmatprep.subr.bf16.mxu0 0
  %1771 = vmatpush1.bf16.msra.mxu0 %v1436
  %1772 = vmatprep.subr.bf16.mxu0 0
  %1773 = vmatpush1.bf16.msra.mxu0 %v1437
  %1774 = vmatprep.subr.bf16.mxu0 0
  %1775 = vmatpush1.bf16.msra.mxu0 %v1438
  %1776 = vmatprep.subr.bf16.mxu0 0
  %1777 = vmatpush1.bf16.msra.mxu0 %v1439
  %1778 = vmatprep.subr.bf16.mxu0 0
  %1779 = vmatpush1.bf16.msra.mxu0 %v1440
  %1780 = vmatprep.subr.bf16.mxu0 0
  %1781 = vmatpush1.bf16.msra.mxu0 %v1441
  %1782 = vmatprep.subr.bf16.mxu0 0
  %1783 = vmatpush1.bf16.msra.mxu0 %v1442
  %1784 = vmatprep.subr.bf16.mxu0 0
  %1785 = vmatpush1.bf16.msra.mxu0 %v1443
  %1786 = vmatprep.subr.bf16.mxu0 0
  %1787 = vmatpush1.bf16.msra.mxu0 %v1444
  %1788 = vmatprep.subr.bf16.mxu0 0
  %1789 = vmatpush1.bf16.msra.mxu0 %v1445
  %1790 = vmatprep.mubr.bf16.mxu0 %v605
  %1791 = vmatmul.mubr.bf16.gmra.mrb[0].mxu0 %v604
  %v1792 = vpop.f32.mrb[0].mxu0
  %v1793 = vadd.f32 %v1753, %v1792
  %v1794 = vpop.f32.mrb[0].mxu0
  %v1795 = vpop.f32.mrb[0].mxu0
  %v1796 = vpop.f32.mrb[0].mxu0
  %1797 = vdwg.mxu0
  %1798 = vmatprep.subr.bf16.mxu0 0
  %1799 = vmatpush1.bf16.msra.mxu0 %v1446
  %1800 = vmatprep.subr.bf16.mxu0 0
  %1801 = vmatpush1.bf16.msra.mxu0 %v1447
  %1802 = vmatprep.subr.bf16.mxu0 0
  %1803 = vmatpush1.bf16.msra.mxu0 %v1448
  %1804 = vmatprep.subr.bf16.mxu0 0
  %1805 = vmatpush1.bf16.msra.mxu0 %v1449
  %1806 = vmatprep.subr.bf16.mxu0 0
  %1807 = vmatpush1.bf16.msra.mxu0 %v1450
  %1808 = vmatprep.subr.bf16.mxu0 0
  %1809 = vmatpush1.bf16.msra.mxu0 %v1451
  %1810 = vmatprep.subr.bf16.mxu0 0
  %1811 = vmatpush1.bf16.msra.mxu0 %v1452
  %1812 = vmatprep.subr.bf16.mxu0 0
  %1813 = vmatpush1.bf16.msra.mxu0 %v1453
  %1814 = vmatprep.subr.bf16.mxu0 0
  %1815 = vmatpush1.bf16.msra.mxu0 %v1454
  %1816 = vmatprep.subr.bf16.mxu0 0
  %1817 = vmatpush1.bf16.msra.mxu0 %v1455
  %1818 = vmatprep.subr.bf16.mxu0 0
  %1819 = vmatpush1.bf16.msra.mxu0 %v1456
  %1820 = vmatprep.subr.bf16.mxu0 0
  %1821 = vmatpush1.bf16.msra.mxu0 %v1457
  %1822 = vmatprep.subr.bf16.mxu0 0
  %1823 = vmatpush1.bf16.msra.mxu0 %v1458
  %1824 = vmatprep.subr.bf16.mxu0 0
  %1825 = vmatpush1.bf16.msra.mxu0 %v1459
  %1826 = vmatprep.subr.bf16.mxu0 0
  %1827 = vmatpush1.bf16.msra.mxu0 %v1460
  %1828 = vmatprep.subr.bf16.mxu0 0
  %1829 = vmatpush1.bf16.msra.mxu0 %v1461
  %1830 = vmatprep.mubr.bf16.mxu0 %v607
  %1831 = vmatmul.mubr.bf16.gmra.mrb[0].mxu0 %v606
  %v1832 = vpop.f32.mrb[0].mxu0
  %v1833 = vadd.f32 %v1793, %v1832
  %v1834 = vpop.f32.mrb[0].mxu0
  %v1835 = vpop.f32.mrb[0].mxu0
  %v1836 = vpop.f32.mrb[0].mxu0
  %1837 = vdwg.mxu0
  %1838 = vmatprep.subr.bf16.mxu0 0
  %1839 = vmatpush1.bf16.msra.mxu0 %v1462
  %1840 = vmatprep.subr.bf16.mxu0 0
  %1841 = vmatpush1.bf16.msra.mxu0 %v1463
  %1842 = vmatprep.subr.bf16.mxu0 0
  %1843 = vmatpush1.bf16.msra.mxu0 %v1464
  %1844 = vmatprep.subr.bf16.mxu0 0
  %1845 = vmatpush1.bf16.msra.mxu0 %v1465
  %1846 = vmatprep.subr.bf16.mxu0 0
  %1847 = vmatpush1.bf16.msra.mxu0 %v1466
  %1848 = vmatprep.subr.bf16.mxu0 0
  %1849 = vmatpush1.bf16.msra.mxu0 %v1467
  %1850 = vmatprep.subr.bf16.mxu0 0
  %1851 = vmatpush1.bf16.msra.mxu0 %v1468
  %1852 = vmatprep.subr.bf16.mxu0 0
  %1853 = vmatpush1.bf16.msra.mxu0 %v1469
  %1854 = vmatprep.subr.bf16.mxu0 0
  %1855 = vmatpush1.bf16.msra.mxu0 %v1470
  %1856 = vmatprep.subr.bf16.mxu0 0
  %1857 = vmatpush1.bf16.msra.mxu0 %v1471
  %1858 = vmatprep.subr.bf16.mxu0 0
  %1859 = vmatpush1.bf16.msra.mxu0 %v1472
  %1860 = vmatprep.subr.bf16.mxu0 0
  %1861 = vmatpush1.bf16.msra.mxu0 %v1473
  %1862 = vmatprep.subr.bf16.mxu0 0
  %1863 = vmatpush1.bf16.msra.mxu0 %v1474
  %1864 = vmatprep.subr.bf16.mxu0 0
  %1865 = vmatpush1.bf16.msra.mxu0 %v1475
  %1866 = vmatprep.subr.bf16.mxu0 0
  %1867 = vmatpush1.bf16.msra.mxu0 %v1476
  %1868 = vmatprep.subr.bf16.mxu0 0
  %1869 = vmatpush1.bf16.msra.mxu0 %v1477
  %1870 = vmatprep.mubr.bf16.mxu0 %v609
  %1871 = vmatmul.mubr.bf16.gmra.mrb[0].mxu0 %v608
  %v1872 = vpop.f32.mrb[0].mxu0
  %v1873 = vadd.f32 %v1833, %v1872
  %v1874 = vpop.f32.mrb[0].mxu0
  %v1875 = vpop.f32.mrb[0].mxu0
  %v1876 = vpop.f32.mrb[0].mxu0
  %1877 = vdwg.mxu0
  %1878 = vmatprep.subr.bf16.mxu0 0
  %1879 = vmatpush1.bf16.msra.mxu0 %v1478
  %1880 = vmatprep.subr.bf16.mxu0 0
  %1881 = vmatpush1.bf16.msra.mxu0 %v1479
  %1882 = vmatprep.subr.bf16.mxu0 0
  %1883 = vmatpush1.bf16.msra.mxu0 %v1480
  %1884 = vmatprep.subr.bf16.mxu0 0
  %1885 = vmatpush1.bf16.msra.mxu0 %v1481
  %1886 = vmatprep.subr.bf16.mxu0 0
  %1887 = vmatpush1.bf16.msra.mxu0 %v1482
  %1888 = vmatprep.subr.bf16.mxu0 0
  %1889 = vmatpush1.bf16.msra.mxu0 %v1483
  %1890 = vmatprep.subr.bf16.mxu0 0
  %1891 = vmatpush1.bf16.msra.mxu0 %v1484
  %1892 = vmatprep.subr.bf16.mxu0 0
  %1893 = vmatpush1.bf16.msra.mxu0 %v1485
  %1894 = vmatprep.subr.bf16.mxu0 0
  %1895 = vmatpush1.bf16.msra.mxu0 %v1486
  %1896 = vmatprep.subr.bf16.mxu0 0
  %1897 = vmatpush1.bf16.msra.mxu0 %v1487
  %1898 = vmatprep.subr.bf16.mxu0 0
  %1899 = vmatpush1.bf16.msra.mxu0 %v1488
  %1900 = vmatprep.subr.bf16.mxu0 0
  %1901 = vmatpush1.bf16.msra.mxu0 %v1489
  %1902 = vmatprep.subr.bf16.mxu0 0
  %1903 = vmatpush1.bf16.msra.mxu0 %v1490
  %1904 = vmatprep.subr.bf16.mxu0 0
  %1905 = vmatpush1.bf16.msra.mxu0 %v1491
  %1906 = vmatprep.subr.bf16.mxu0 0
  %1907 = vmatpush1.bf16.msra.mxu0 %v1492
  %1908 = vmatprep.subr.bf16.mxu0 0
  %1909 = vmatpush1.bf16.msra.mxu0 %v1493
  %1910 = vmatprep.mubr.bf16.mxu0 %v611
  %1911 = vmatmul.mubr.bf16.gmra.mrb[0].mxu0 %v610
  %v1912 = vpop.f32.mrb[0].mxu0
  %v1913 = vadd.f32 %v1873, %v1912
  %v1914 = vpop.f32.mrb[0].mxu0
  %v1915 = vpop.f32.mrb[0].mxu0
  %v1916 = vpop.f32.mrb[0].mxu0
  %1917 = vdwg.mxu0
  %1918 = vmatprep.subr.bf16.mxu0 0
  %1919 = vmatpush1.bf16.msra.mxu0 %v1494
  %1920 = vmatprep.subr.bf16.mxu0 0
  %1921 = vmatpush1.bf16.msra.mxu0 %v1495
  %1922 = vmatprep.subr.bf16.mxu0 0
  %1923 = vmatpush1.bf16.msra.mxu0 %v1496
  %1924 = vmatprep.subr.bf16.mxu0 0
  %1925 = vmatpush1.bf16.msra.mxu0 %v1497
  %1926 = vmatprep.subr.bf16.mxu0 0
  %1927 = vmatpush1.bf16.msra.mxu0 %v1498
  %1928 = vmatprep.subr.bf16.mxu0 0
  %1929 = vmatpush1.bf16.msra.mxu0 %v1499
  %1930 = vmatprep.subr.bf16.mxu0 0
  %1931 = vmatpush1.bf16.msra.mxu0 %v1500
  %1932 = vmatprep.subr.bf16.mxu0 0
  %1933 = vmatpush1.bf16.msra.mxu0 %v1501
  %1934 = vmatprep.subr.bf16.mxu0 0
  %1935 = vmatpush1.bf16.msra.mxu0 %v1502
  %1936 = vmatprep.subr.bf16.mxu0 0
  %1937 = vmatpush1.bf16.msra.mxu0 %v1503
  %1938 = vmatprep.subr.bf16.mxu0 0
  %1939 = vmatpush1.bf16.msra.mxu0 %v1504
  %1940 = vmatprep.subr.bf16.mxu0 0
  %1941 = vmatpush1.bf16.msra.mxu0 %v1505
  %1942 = vmatprep.subr.bf16.mxu0 0
  %1943 = vmatpush1.bf16.msra.mxu0 %v1506
  %1944 = vmatprep.subr.bf16.mxu0 0
  %1945 = vmatpush1.bf16.msra.mxu0 %v1507
  %1946 = vmatprep.subr.bf16.mxu0 0
  %1947 = vmatpush1.bf16.msra.mxu0 %v1508
  %1948 = vmatprep.subr.bf16.mxu0 0
  %1949 = vmatpush1.bf16.msra.mxu0 %v1509
  %1950 = vmatprep.mubr.bf16.mxu0 %v613
  %1951 = vmatmul.mubr.bf16.gmra.mrb[0].mxu0 %v612
  %v1952 = vpop.f32.mrb[0].mxu0
  %v1953 = vadd.f32 %v1913, %v1952
  %v1954 = vpop.f32.mrb[0].mxu0
  %v1955 = vpop.f32.mrb[0].mxu0
  %v1956 = vpop.f32.mrb[0].mxu0
  %1957 = vdwg.mxu0
  %v1958 = vadd.f32 %v597, %v1953
  %vm1959 = vcmask 261120
  %1960 = vst.msk [vmem:[#allocation2] sm:$0xff] %vm1959, %v1958
  // Predicated region
  $region22: #{tpu_custom_call.1} parent=0 // pred_check
    %p1961 = pneg %p19
  $region23: #{tpu_custom_call.1} parent=0 // pred_check_branch
    %1963 = sbr.rel (%p1961) target = $region25
  $region24: #{tpu_custom_call.1} parent=0 // pred_region
    %v1964 = vld [vmem:[#allocation2] sm:$0xff]
    %v1965 = vmul.f32 %v1964, 0.125
    %v1966 = vld [vmem:[%s2] sm:$0xff]
    %v1967 = vld [vmem:[%s2 + $0x8] sm:$0xff]
    %v1968 = vld [vmem:[%s2 + $0x10] sm:$0xff]
    %v1969 = vld [vmem:[%s2 + $0x18] sm:$0xff]
    %s1970 = sld [smem:[#allocation3]]
    %v1971 = vstv %s1970
    %v1973 = vsel %vm1959, %v1965, 0
    %1975 = vmatprep.subr.mxu0 0.0
    %1976 = vmatpush1.msra.mxu0 %v1966
    %1977 = vmatprep.subr.mxu0 0.0
    %1978 = vmatpush1.msra.mxu0 %v1967
    %1979 = vmatprep.subr.mxu0 0.0
    %1980 = vmatpush1.msra.mxu0 %v1968
    %1981 = vmatprep.subr.mxu0 0.0
    %1982 = vmatpush1.msra.mxu0 %v1969
    %1983 = vmatprep.subr.mxu0 0.0
    %1984 = vmatpush1.msra.mxu0 0.0
    %1985 = vmatprep.subr.mxu0 0.0
    %1986 = vmatpush1.msra.mxu0 0.0
    %1987 = vmatprep.subr.mxu0 0.0
    %1988 = vmatpush1.msra.mxu0 0.0
    %1989 = vmatprep.subr.mxu0 0.0
    %1990 = vmatpush1.msra.mxu0 0.0
    %1991 = vmatprep.subr.mxu0 0.0
    %1992 = vmatpush1.msra.mxu0 0.0
    %1993 = vmatprep.subr.mxu0 0.0
    %1994 = vmatpush1.msra.mxu0 0.0
    %1995 = vmatprep.subr.mxu0 0.0
    %1996 = vmatpush1.msra.mxu0 0.0
    %1997 = vmatprep.subr.mxu0 0.0
    %1998 = vmatpush1.msra.mxu0 0.0
    %1999 = vmatprep.subr.mxu0 0.0
    %2000 = vmatpush1.msra.mxu0 0.0
    %2001 = vmatprep.subr.mxu0 0.0
    %2002 = vmatpush1.msra.mxu0 0.0
    %2003 = vmatprep.subr.mxu0 0.0
    %2004 = vmatpush1.msra.mxu0 0.0
    %2005 = vmatprep.subr.mxu0 0.0
    %2006 = vmatpush1.msra.mxu0 0.0
    %2007 = vmatprep.subr.mxu0 0.0
    %2008 = vmatpush1.msra.mxu0 0.0
    %2009 = vmatprep.subr.mxu0 0.0
    %2010 = vmatpush1.msra.mxu0 0.0
    %2011 = vmatprep.subr.mxu0 0.0
    %2012 = vmatpush1.msra.mxu0 0.0
    %2013 = vmatprep.subr.mxu0 0.0
    %2014 = vmatpush1.msra.mxu0 0.0
    %2015 = vmatprep.subr.mxu0 0.0
    %2016 = vmatpush1.msra.mxu0 0.0
    %2017 = vmatprep.subr.mxu0 0.0
    %2018 = vmatpush1.msra.mxu0 0.0
    %2019 = vmatprep.subr.mxu0 0.0
    %2020 = vmatpush1.msra.mxu0 0.0
    %2021 = vmatprep.subr.mxu0 0.0
    %2022 = vmatpush1.msra.mxu0 0.0
    %2023 = vmatprep.subr.mxu0 0.0
    %2024 = vmatpush1.msra.mxu0 0.0
    %2025 = vmatprep.subr.mxu0 0.0
    %2026 = vmatpush1.msra.mxu0 0.0
    %2027 = vmatprep.subr.mxu0 0.0
    %2028 = vmatpush1.msra.mxu0 0.0
    %2029 = vmatprep.subr.mxu0 0.0
    %2030 = vmatpush1.msra.mxu0 0.0
    %2031 = vmatprep.subr.mxu0 0.0
    %2032 = vmatpush1.msra.mxu0 0.0
    %2033 = vmatprep.subr.mxu0 0.0
    %2034 = vmatpush1.msra.mxu0 0.0
    %2035 = vmatprep.subr.mxu0 0.0
    %2036 = vmatpush1.msra.mxu0 0.0
    %2037 = vmatprep.subr.mxu0 0.0
    %2038 = vmatpush1.msra.mxu0 0.0
    %2039 = vmatprep.mubr.f32.mxu0 0.0
    %2040 = vmatmul.mubr.f32.gmra.mrb[0].mxu0 %v1973
    %v2041 = vpop.f32.mrb[0].mxu0
    %v2042 = vadd.f32 %v1971, %v2041
    %v2043 = vpop.f32.mrb[0].mxu0
    %2044 = vdwg.mxu0
    %v2045 = vxor.u32 %v2042, 2147483648
    %v2046 = vmul.f32 %v2045, 1.442695
    %v2047 = vpow.pop %v2046
    %v2048 = vadd.f32 %v2047, 1.0
    %v2049 = vrcp.pop %v2048
    %v2050 = vmul.f32 1.0, %v2049
    %vm2051 = vcmask 7168
    %2052 = vst.msk [vmem:[%s4] sm:$0xff] %vm2051, %v2050
  $region25: #{tpu_custom_call.1} parent=0 // pred_fallthru
    _
  // Predicated region
  $region26: #{tpu_custom_call.1} parent=0 // pred_check
    _
  $region27: #{tpu_custom_call.1} parent=0 // pred_check_branch
    %2054 = sbr.rel (0) target = $region29
  $region28: #{tpu_custom_call.1} parent=0 // pred_region
    _
  $region29: #{tpu_custom_call.1} parent=0 // pred_fallthru
    _
  // Predicated region
  $region30: #{tpu_custom_call.1} parent=0 // pred_check
    _
  $region31: #{tpu_custom_call.1} parent=0 // pred_check_branch
    %2056 = sbr.rel (0) target = $region33
  $region32: #{tpu_custom_call.1} parent=0 // pred_region
    _
  $region33: #{tpu_custom_call.1} parent=0 // pred_fallthru
    _

</llo_original>
